<compile_context>
chip_gen: v7x
topology: tpu7x:2x2x1
jax: 0.10.0
libtpu: 0.0.40
codegen_flags: <defaults>
</compile_context>

<pallas_src>
import functools
import math

import jax
import jax.numpy as jnp
from jax import lax
from jax.experimental import pallas as pl
from jax.experimental.pallas import tpu as pltpu


_DIVISORS_128 = (2, 4, 8, 16, 32, 64)


def _lowest(dtype):
    dtype = jnp.dtype(dtype)
    if jnp.issubdtype(dtype, jnp.floating):
        return float("-inf")
    return int(jnp.iinfo(dtype).min)


def _round_up(a, b):
    return ((a + b - 1) // b) * b


def _packed_argmax_match_kernel(p_ref, y_ref, o_ref, *, seg_width, n_seg, n_rows):
    """Lane-packed tile (TM, n_seg*seg_width) -> scalar count of argmax matches.

    Per-segment argmax is a segmented suffix scan: log2(seg_width) steps of
    pltpu.roll + masked compare/select compute all n_seg segments of every row
    at once (4*log2(seg_width) XLU ops per tile instead of 4*n_seg full-lane
    reductions).  A later lane only replaces an earlier one on a strictly
    greater value, so torch.argmax first-occurrence tie-breaking is preserved.
    """
    p = p_ref[...]
    y = y_ref[...]
    tm, lanes = p.shape
    log2_w = seg_width.bit_length() - 1

    col = lax.broadcasted_iota(jnp.int32, (tm, lanes), 1)
    off = jnp.bitwise_and(col, seg_width - 1)        # position inside segment
    p_idx = off
    y_idx = off

    s = 1
    while s < seg_width:                             # static unroll, <= 6 steps
        can = (off + s) < seg_width                  # source lane in same segment
        shift = lanes - s                            # bring lane (i + s) into lane i
        p_v = pltpu.roll(p, shift, 1)
        p_i = pltpu.roll(p_idx, shift, 1)
        take = can & (p_v > p)                       # strict '>' keeps first occurrence
        p = jnp.where(take, p_v, p)
        p_idx = jnp.where(take, p_i, p_idx)

        y_v = pltpu.roll(y, shift, 1)
        y_i = pltpu.roll(y_idx, shift, 1)
        take = can & (y_v > y)
        y = jnp.where(take, y_v, y)
        y_idx = jnp.where(take, y_i, y_idx)
        s *= 2

    # Segment-start lanes now hold the per-(row, segment) argmax.  Mask padded
    # columns (off != 0 only), padded tail rows and the ragged last grid block
    # (logical row index >= n_rows) so they contribute zero matches.
    row = lax.broadcasted_iota(jnp.int32, (tm, lanes), 0)
    seg = jnp.right_shift(col, log2_w)
    logical = (pl.program_id(0) * tm + row) * n_seg + seg
    match = (off == 0) & (logical < n_rows) & (p_idx == y_idx)
    o_ref[...] = jnp.broadcast_to(jnp.sum(match.astype(jnp.float32)), o_ref.shape)


def _wide_argmax_match_kernel(p_ref, y_ref, o_ref, *, n_rows):
    """Fallback for C > 64 (no lane packing): plain max + first-index reductions."""
    p = p_ref[...]
    y = y_ref[...]
    tm, n_cls = p.shape
    off = lax.broadcasted_iota(jnp.int32, (tm, n_cls), 1)
    pm = jnp.max(p, axis=-1, keepdims=True)
    ym = jnp.max(y, axis=-1, keepdims=True)
    p_idx = jnp.min(jnp.where(p == pm, off, n_cls), axis=-1, keepdims=True)
    y_idx = jnp.min(jnp.where(y == ym, off, n_cls), axis=-1, keepdims=True)
    row = lax.broadcasted_iota(jnp.int32, (tm, 1), 0)
    valid = (pl.program_id(0) * tm + row) < n_rows
    match = valid & (p_idx == y_idx)
    o_ref[...] = jnp.broadcast_to(jnp.sum(match.astype(jnp.float32)), o_ref.shape)


def accuracy(pred, y, *, block_rows=2048):
    """Pallas TPU Accuracy.forward: mean(argmax(pred,-1) == argmax(y,-1))."""
    assert pred.shape == y.shape, "pred / y shape mismatch"
    C = pred.shape[-1]
    M = math.prod(pred.shape[:-1])
    if C == 1 or M == 0:   # argmax over a size-1 axis is always 0 -> all match
        return jnp.float32(1.0)

    pred2d = pred.reshape(M, C)
    y2d = y.reshape(M, C)

    # Lane packing: pad the class axis to the next divisor of 128 (when
    # C <= 64) so R = 128 // CP logical rows share one lane-dense 128-wide row.
    if C <= 64:
        CP = next(d for d in _DIVISORS_128 if d >= C)
        R = 128 // CP
    else:
        CP, R = C, 1
    MP = pl.cdiv(M, R)                  # packed rows
    L = R * CP

    if CP != C or M % R != 0:
        # One fused pad pass, only when the free reshape is impossible.
        # Column pad uses the dtype's lowest value so it never wins an argmax;
        # padded tail rows are masked out inside the kernel (logical >= M).
        row_pad = MP * R - M
        pred2d = jnp.pad(pred2d, ((0, row_pad), (0, CP - C)),
                         constant_values=_lowest(pred2d.dtype))
        y2d = jnp.pad(y2d, ((0, row_pad), (0, CP - C)),
                      constant_values=_lowest(y2d.dtype))
    pred_p = pred2d.reshape(MP, L)      # contiguous -> free (no-copy) reshape
    y_p = y2d.reshape(MP, L)

    # Packed rows per grid step: big tiles (~1-2 MiB / input) to amortize the
    # ~0.35 us per-step pipeline overhead, capped so G >= 2 (both v7x cores on
    # the "parallel" axis) and so double-buffered VMEM stays small; rounded to
    # the dtype sublane multiple (8 f32 / 16 bf16 / 32 int8).
    isz = max(pred_p.dtype.itemsize, y_p.dtype.itemsize)
    sub = max(8, 32 // pred_p.dtype.itemsize, 32 // y_p.dtype.itemsize)
    vmem_rows = max(sub, (2 * 1024 * 1024) // (L * isz))
    if MP <= sub:
        tm = MP                                          # full-dim block
    else:
        tm = _round_up(min(block_rows, vmem_rows, pl.cdiv(MP, 2)), sub)
    G = pl.cdiv(MP, tm)

    if R > 1:
        kernel = functools.partial(_packed_argmax_match_kernel,
                                   seg_width=CP, n_seg=R, n_rows=M)
    else:
        kernel = functools.partial(_wide_argmax_match_kernel, n_rows=M)

    cost = pl.CostEstimate(
        flops=12 * MP * L, transcendentals=0,
        bytes_accessed=(pred_p.size * pred_p.dtype.itemsize
                        + y_p.size * y_p.dtype.itemsize + G * 8 * 128 * 4))

    partials = pl.pallas_call(
        kernel,
        out_shape=jax.ShapeDtypeStruct((G * 8, 128), jnp.float32),
        grid=(G,),
        in_specs=[pl.BlockSpec((tm, L), lambda g: (g, 0)),
                  pl.BlockSpec((tm, L), lambda g: (g, 0))],
        out_specs=pl.BlockSpec((8, 128), lambda g: (g, 0)),
        compiler_params=pltpu.CompilerParams(
            dimension_semantics=("parallel",),
            vmem_limit_bytes=32 * 1024 * 1024),
        cost_estimate=cost,
    )(pred_p, y_p)

    total = jnp.sum(partials.reshape(G, 8, 128)[:, 0, 0])
    # TODO(synk): PyTorch returns float64 (.double()); TPU computes the mean in
    # float32, and NaN rows follow max-compare semantics rather than torch's.
    return total / jnp.float32(M)


def _ref_accuracy(pred, y):
    return jnp.mean(
        (jnp.argmax(pred, axis=-1) == jnp.argmax(y, axis=-1)).astype(jnp.float32))


if __name__ == "__main__":
    key = jax.random.PRNGKey(0)
    shapes = [
        (4, 256, 32),   # packed (R=4), zero-copy reshape, 2 grid blocks
        (3, 100, 32),   # packed, ragged last block -> in-kernel row masking
        (2, 7, 10),     # class axis padded 10 -> 16 (R=8) + tail-row masking
        (4, 5, 130),    # wide fallback (C > 64), ragged last block
    ]
    for shp in shapes:
        kp, ky, key = jax.random.split(key, 3)
        pred = jax.random.normal(kp, shp, dtype=jnp.float32)
        y = jax.random.normal(ky, shp, dtype=jnp.float32)
        acc = jax.block_until_ready(accuracy(pred, y))
        ref = _ref_accuracy(pred, y)
        assert jnp.allclose(acc, ref, atol=1e-6), (shp, float(acc), float(ref))
    print("KERNEL_OK")
</pallas_src>

<mosaic_0001>
module attributes {stable_mosaic.version = 11 : i64} {
  func.func @_packed_argmax_match_kernel(%arg0: i32, %arg1: memref<128x128xf32, #tpu.memory_space<vmem>>, %arg2: memref<128x128xf32, #tpu.memory_space<vmem>>, %arg3: memref<8x128xf32, #tpu.memory_space<vmem>>) attributes {dimension_semantics = [#tpu.dimension_semantics<parallel>], iteration_bounds = array<i64: 2>, scalar_prefetch = 0 : i64, scratch_operands = 0 : i64, tpu.core_type = #tpu.core_type<tc>, window_params = [{transform_indices = @transform_0, window_bounds = array<i64: 128, 128>}, {transform_indices = @transform_1, window_bounds = array<i64: 128, 128>}, {transform_indices = @transform_2, window_bounds = array<i64: 8, 128>}]} {
    %c0 = arith.constant 0 : index
    %c0_0 = arith.constant 0 : index
    %0 = vector.load %arg1[%c0, %c0_0] : memref<128x128xf32, #tpu.memory_space<vmem>>, vector<128x128xf32>
    %c0_1 = arith.constant 0 : index
    %c0_2 = arith.constant 0 : index
    %1 = vector.load %arg2[%c0_1, %c0_2] : memref<128x128xf32, #tpu.memory_space<vmem>>, vector<128x128xf32>
    %2 = tpu.iota {dimensions = array<i32: 1>} : vector<128x128xi32>
    %c31_i32 = arith.constant 31 : i32
    %3 = vector.broadcast %c31_i32 : i32 to vector<128x128xi32>
    %4 = arith.andi %2, %3 : vector<128x128xi32>
    %c1_i32 = arith.constant 1 : i32
    %5 = vector.broadcast %c1_i32 : i32 to vector<128x128xi32>
    %6 = arith.addi %4, %5 : vector<128x128xi32>
    %c32_i32 = arith.constant 32 : i32
    %7 = vector.broadcast %c32_i32 : i32 to vector<128x128xi32>
    %8 = arith.cmpi slt, %6, %7 : vector<128x128xi32>
    %c127_i32 = arith.constant 127 : i32
    %9 = tpu.dynamic_rotate %0 by %c127_i32 dim 1 : vector<128x128xf32>, i32 -> vector<128x128xf32>
    %c127_i32_3 = arith.constant 127 : i32
    %10 = tpu.dynamic_rotate %4 by %c127_i32_3 dim 1 : vector<128x128xi32>, i32 -> vector<128x128xi32>
    %11 = arith.cmpf ogt, %9, %0 : vector<128x128xf32>
    %12 = arith.andi %8, %11 : vector<128x128xi1>
    %13 = arith.select %12, %9, %0 : vector<128x128xi1>, vector<128x128xf32>
    %14 = arith.select %12, %10, %4 : vector<128x128xi1>, vector<128x128xi32>
    %c127_i32_4 = arith.constant 127 : i32
    %15 = tpu.dynamic_rotate %1 by %c127_i32_4 dim 1 : vector<128x128xf32>, i32 -> vector<128x128xf32>
    %c127_i32_5 = arith.constant 127 : i32
    %16 = tpu.dynamic_rotate %4 by %c127_i32_5 dim 1 : vector<128x128xi32>, i32 -> vector<128x128xi32>
    %17 = arith.cmpf ogt, %15, %1 : vector<128x128xf32>
    %18 = arith.andi %8, %17 : vector<128x128xi1>
    %19 = arith.select %18, %15, %1 : vector<128x128xi1>, vector<128x128xf32>
    %20 = arith.select %18, %16, %4 : vector<128x128xi1>, vector<128x128xi32>
    %c2_i32 = arith.constant 2 : i32
    %21 = vector.broadcast %c2_i32 : i32 to vector<128x128xi32>
    %22 = arith.addi %4, %21 : vector<128x128xi32>
    %c32_i32_6 = arith.constant 32 : i32
    %23 = vector.broadcast %c32_i32_6 : i32 to vector<128x128xi32>
    %24 = arith.cmpi slt, %22, %23 : vector<128x128xi32>
    %c126_i32 = arith.constant 126 : i32
    %25 = tpu.dynamic_rotate %13 by %c126_i32 dim 1 : vector<128x128xf32>, i32 -> vector<128x128xf32>
    %c126_i32_7 = arith.constant 126 : i32
    %26 = tpu.dynamic_rotate %14 by %c126_i32_7 dim 1 : vector<128x128xi32>, i32 -> vector<128x128xi32>
    %27 = arith.cmpf ogt, %25, %13 : vector<128x128xf32>
    %28 = arith.andi %24, %27 : vector<128x128xi1>
    %29 = arith.select %28, %25, %13 : vector<128x128xi1>, vector<128x128xf32>
    %30 = arith.select %28, %26, %14 : vector<128x128xi1>, vector<128x128xi32>
    %c126_i32_8 = arith.constant 126 : i32
    %31 = tpu.dynamic_rotate %19 by %c126_i32_8 dim 1 : vector<128x128xf32>, i32 -> vector<128x128xf32>
    %c126_i32_9 = arith.constant 126 : i32
    %32 = tpu.dynamic_rotate %20 by %c126_i32_9 dim 1 : vector<128x128xi32>, i32 -> vector<128x128xi32>
    %33 = arith.cmpf ogt, %31, %19 : vector<128x128xf32>
    %34 = arith.andi %24, %33 : vector<128x128xi1>
    %35 = arith.select %34, %31, %19 : vector<128x128xi1>, vector<128x128xf32>
    %36 = arith.select %34, %32, %20 : vector<128x128xi1>, vector<128x128xi32>
    %c4_i32 = arith.constant 4 : i32
    %37 = vector.broadcast %c4_i32 : i32 to vector<128x128xi32>
    %38 = arith.addi %4, %37 : vector<128x128xi32>
    %c32_i32_10 = arith.constant 32 : i32
    %39 = vector.broadcast %c32_i32_10 : i32 to vector<128x128xi32>
    %40 = arith.cmpi slt, %38, %39 : vector<128x128xi32>
    %c124_i32 = arith.constant 124 : i32
    %41 = tpu.dynamic_rotate %29 by %c124_i32 dim 1 : vector<128x128xf32>, i32 -> vector<128x128xf32>
    %c124_i32_11 = arith.constant 124 : i32
    %42 = tpu.dynamic_rotate %30 by %c124_i32_11 dim 1 : vector<128x128xi32>, i32 -> vector<128x128xi32>
    %43 = arith.cmpf ogt, %41, %29 : vector<128x128xf32>
    %44 = arith.andi %40, %43 : vector<128x128xi1>
    %45 = arith.select %44, %41, %29 : vector<128x128xi1>, vector<128x128xf32>
    %46 = arith.select %44, %42, %30 : vector<128x128xi1>, vector<128x128xi32>
    %c124_i32_12 = arith.constant 124 : i32
    %47 = tpu.dynamic_rotate %35 by %c124_i32_12 dim 1 : vector<128x128xf32>, i32 -> vector<128x128xf32>
    %c124_i32_13 = arith.constant 124 : i32
    %48 = tpu.dynamic_rotate %36 by %c124_i32_13 dim 1 : vector<128x128xi32>, i32 -> vector<128x128xi32>
    %49 = arith.cmpf ogt, %47, %35 : vector<128x128xf32>
    %50 = arith.andi %40, %49 : vector<128x128xi1>
    %51 = arith.select %50, %47, %35 : vector<128x128xi1>, vector<128x128xf32>
    %52 = arith.select %50, %48, %36 : vector<128x128xi1>, vector<128x128xi32>
    %c8_i32 = arith.constant 8 : i32
    %53 = vector.broadcast %c8_i32 : i32 to vector<128x128xi32>
    %54 = arith.addi %4, %53 : vector<128x128xi32>
    %c32_i32_14 = arith.constant 32 : i32
    %55 = vector.broadcast %c32_i32_14 : i32 to vector<128x128xi32>
    %56 = arith.cmpi slt, %54, %55 : vector<128x128xi32>
    %c120_i32 = arith.constant 120 : i32
    %57 = tpu.dynamic_rotate %45 by %c120_i32 dim 1 : vector<128x128xf32>, i32 -> vector<128x128xf32>
    %c120_i32_15 = arith.constant 120 : i32
    %58 = tpu.dynamic_rotate %46 by %c120_i32_15 dim 1 : vector<128x128xi32>, i32 -> vector<128x128xi32>
    %59 = arith.cmpf ogt, %57, %45 : vector<128x128xf32>
    %60 = arith.andi %56, %59 : vector<128x128xi1>
    %61 = arith.select %60, %57, %45 : vector<128x128xi1>, vector<128x128xf32>
    %62 = arith.select %60, %58, %46 : vector<128x128xi1>, vector<128x128xi32>
    %c120_i32_16 = arith.constant 120 : i32
    %63 = tpu.dynamic_rotate %51 by %c120_i32_16 dim 1 : vector<128x128xf32>, i32 -> vector<128x128xf32>
    %c120_i32_17 = arith.constant 120 : i32
    %64 = tpu.dynamic_rotate %52 by %c120_i32_17 dim 1 : vector<128x128xi32>, i32 -> vector<128x128xi32>
    %65 = arith.cmpf ogt, %63, %51 : vector<128x128xf32>
    %66 = arith.andi %56, %65 : vector<128x128xi1>
    %67 = arith.select %66, %63, %51 : vector<128x128xi1>, vector<128x128xf32>
    %68 = arith.select %66, %64, %52 : vector<128x128xi1>, vector<128x128xi32>
    %c16_i32 = arith.constant 16 : i32
    %69 = vector.broadcast %c16_i32 : i32 to vector<128x128xi32>
    %70 = arith.addi %4, %69 : vector<128x128xi32>
    %c32_i32_18 = arith.constant 32 : i32
    %71 = vector.broadcast %c32_i32_18 : i32 to vector<128x128xi32>
    %72 = arith.cmpi slt, %70, %71 : vector<128x128xi32>
    %c112_i32 = arith.constant 112 : i32
    %73 = tpu.dynamic_rotate %61 by %c112_i32 dim 1 : vector<128x128xf32>, i32 -> vector<128x128xf32>
    %c112_i32_19 = arith.constant 112 : i32
    %74 = tpu.dynamic_rotate %62 by %c112_i32_19 dim 1 : vector<128x128xi32>, i32 -> vector<128x128xi32>
    %75 = arith.cmpf ogt, %73, %61 : vector<128x128xf32>
    %76 = arith.andi %72, %75 : vector<128x128xi1>
    %77 = arith.select %76, %74, %62 : vector<128x128xi1>, vector<128x128xi32>
    %c112_i32_20 = arith.constant 112 : i32
    %78 = tpu.dynamic_rotate %67 by %c112_i32_20 dim 1 : vector<128x128xf32>, i32 -> vector<128x128xf32>
    %c112_i32_21 = arith.constant 112 : i32
    %79 = tpu.dynamic_rotate %68 by %c112_i32_21 dim 1 : vector<128x128xi32>, i32 -> vector<128x128xi32>
    %80 = arith.cmpf ogt, %78, %67 : vector<128x128xf32>
    %81 = arith.andi %72, %80 : vector<128x128xi1>
    %82 = arith.select %81, %79, %68 : vector<128x128xi1>, vector<128x128xi32>
    %83 = tpu.iota {dimensions = array<i32: 0>} : vector<128x128xi32>
    %c5_i32 = arith.constant 5 : i32
    %84 = vector.broadcast %c5_i32 : i32 to vector<128x128xi32>
    %85 = arith.shrsi %2, %84 : vector<128x128xi32>
    %c128_i32 = arith.constant 128 : i32
    %86 = arith.muli %arg0, %c128_i32 : i32
    %87 = vector.broadcast %86 : i32 to vector<128x128xi32>
    %88 = arith.addi %87, %83 : vector<128x128xi32>
    %c4_i32_22 = arith.constant 4 : i32
    %89 = vector.broadcast %c4_i32_22 : i32 to vector<128x128xi32>
    %90 = arith.muli %88, %89 : vector<128x128xi32>
    %91 = arith.addi %90, %85 : vector<128x128xi32>
    %c0_i32 = arith.constant 0 : i32
    %92 = vector.broadcast %c0_i32 : i32 to vector<128x128xi32>
    %93 = arith.cmpi eq, %4, %92 : vector<128x128xi32>
    %c1024_i32 = arith.constant 1024 : i32
    %94 = vector.broadcast %c1024_i32 : i32 to vector<128x128xi32>
    %95 = arith.cmpi slt, %91, %94 : vector<128x128xi32>
    %96 = arith.andi %93, %95 : vector<128x128xi1>
    %97 = arith.cmpi eq, %77, %82 : vector<128x128xi32>
    %98 = arith.andi %96, %97 : vector<128x128xi1>
    %99 = arith.extui %98 : vector<128x128xi1> to vector<128x128xi32>
    %100 = arith.sitofp %99 : vector<128x128xi32> to vector<128x128xf32>
    %101 = vector.shape_cast %100 : vector<128x128xf32> to vector<1x128x128xf32>
    %cst = arith.constant dense<0.000000e+00> : vector<1xf32>
    %102 = vector.multi_reduction <add>, %101, %cst [1, 2] : vector<1x128x128xf32> to vector<1xf32>
    %103 = vector.shape_cast %102 : vector<1xf32> to vector<1x1x1xf32>
    %104 = vector.extract %103[0, 0, 0] : f32 from vector<1x1x1xf32>
    %105 = vector.broadcast %104 : f32 to vector<8x128xf32>
    %c0_23 = arith.constant 0 : index
    %c0_24 = arith.constant 0 : index
    %106 = vector.load %arg3[%c0_23, %c0_24] : memref<8x128xf32, #tpu.memory_space<vmem>>, vector<8x128xf32>
    tpu.vector_store %arg3[%c0_23, %c0_24], %105 {strides = array<i32>} : memref<8x128xf32, #tpu.memory_space<vmem>>, vector<8x128xf32>,
    return
  }
  func.func @transform_0(%arg0: i32) -> (i32, i32) {
    %c0_i32 = arith.constant 0 : i32
    %c0_i32_0 = arith.constant 0 : i32
    return %arg0, %c0_i32 : i32, i32
  }
  func.func @transform_1(%arg0: i32) -> (i32, i32) {
    %c0_i32 = arith.constant 0 : i32
    %c0_i32_0 = arith.constant 0 : i32
    return %arg0, %c0_i32 : i32, i32
  }
  func.func @transform_2(%arg0: i32) -> (i32, i32) {
    %c0_i32 = arith.constant 0 : i32
    %c0_i32_0 = arith.constant 0 : i32
    return %arg0, %c0_i32 : i32, i32
  }
}

</mosaic_0001>

<llo_original>
// kernel: tpu_custom_call.1
$region0: #{tpu_custom_call.1}
  #allocation0 [shape = 'u32[]', space=smem, size = 0x4, offset = 0x4, fixed_abs, tag = 'smem constant byte address 0x4 - core index']
  #allocation1 [shape = 'u32[144,128]{1,0:T(1,128)}', space=vmem, size = 0x12000, scoped, tag = 'internal scratch']
  %s0 = inlined_call_operand.hbm [shape: f32[256,128], index: 0, kind: input, shape index: {}]
  %s1 = inlined_call_operand.hbm [shape: f32[256,128], index: 1, kind: input, shape index: {}]
  %s2 = inlined_call_operand.hbm [shape: f32[16,128], index: 2, kind: output, shape index: {}]
  %s3 = sld [smem:[#allocation0]]
  $region49: #{tpu_custom_call.1} parent=0
    _
  %s5 = ssub.s32 1, %s3
  %s6 = scalar_select 0, %s5, %s3
  $region1: #{tpu_custom_call.1} parent=0
    #allocation2 [shape = 'u8[131072]{0}', space=vmem, size = 0x20000, scoped, tag = 'input window, operand 0']
    #allocation3 [shape = 's32[2]{0}', space=sflag, size = 0x8, scoped, tag = 'scoped memory for tpu_custom_call.1']
    #allocation4 [shape = 's32[2]{0}', space=sflag, size = 0x8, scoped, tag = 'scoped memory for tpu_custom_call.1']
    #allocation5 [shape = 'u8[131072]{0}', space=vmem, size = 0x20000, scoped, tag = 'input window, operand 1']
    #allocation6 [shape = 's32[2]{0}', space=sflag, size = 0x8, scoped, tag = 'scoped memory for tpu_custom_call.1']
    #allocation7 [shape = 'u8[8192]{0}', space=vmem, size = 0x2000, scoped, tag = 'output window, operand 0']
    %7 = vsyncpa [#allocation3], 0
    %s8 = scalar_lea.sflag [#allocation3], 1
    %9 = vsyncpa %s8, 0
    %10 = vsyncpa [#allocation6], 0
    %s11 = scalar_lea.sflag [#allocation6], 1
    %12 = vsyncpa %s11, 0
    %13 = vsyncpa [#allocation4], 0
    %s14 = scalar_lea.sflag [#allocation4], 1
    %15 = vsyncpa %s14, 0
    loop: start=0, step=1, limit=4
    $region2: #{tpu_custom_call.1} parent=1 // loop_pre_header
      _
    $region3: #{tpu_custom_call.1} parent=1 // loop_header
      %s17 = sphi 0, %s21
      %p18 = scmp.ge.s32.totalorder %s17, 4
      %s27 = sphi 0, %s29
      %s30 = sphi 0, %s27
      %s31 = sphi 0, %s30
      %s47 = sphi 0, %s31
      %s53 = sphi 0, %s55
      %s56 = sphi 0, %s53
      %s57 = sphi 0, %s56
      %s73 = sphi 0, %s57
      %s79 = sphi 0, %s81
      %s82 = sphi 0, %s79
      %s83 = sphi 0, %s82
      %s99 = sphi 0, %s83
    $region4: #{tpu_custom_call.1} parent=1 // loop_header_branch
      %20 = sbr.rel (%p18) target = $region8
    $region5: #{tpu_custom_call.1} parent=1 // loop_body
      %s22 = ssub.s32 %s17, 1
      %s23 = ssub.s32 %s17, 2
      %s24 = sadd.s32 %s17, 1
      %s25 = ssub.s32 %s17, %s24
      %p26 = scmp.eq.s32.totalorder %s25, 0
      %s28 = sadd.s32 %s27, 1
      %s29 = scalar_select %p26, %s27, %s28
      %p32 = pneg %p26
      %p33 = scmp.eq.s32.totalorder %s17, 1
      %p34 = por %p32, %p33
      %p35 = scmp.ne.s32.totalorder %s27, %s30
      %p36 = scmp.eq.s32.totalorder %s17, 0
      %p37 = por %p35, %p36
      %p38 = scmp.ne.s32.totalorder %s27, %s30
      %p39 = scmp.eq.s32.totalorder %s22, 1
      %p40 = por %p38, %p39
      %p41 = scmp.ne.s32.totalorder %s30, %s31
      %p42 = scmp.eq.s32.totalorder %s22, 0
      %p43 = por %p41, %p42
      %p44 = scmp.ne.s32.totalorder %s30, %s31
      %p45 = scmp.eq.s32.totalorder %s23, 1
      %p46 = por %p44, %p45
      %p48 = scmp.ne.s32.totalorder %s31, %s47
      %p49 = scmp.eq.s32.totalorder %s23, 0
      %p50 = por %p48, %p49
      %s51 = ssub.s32 %s17, %s24
      %p52 = scmp.eq.s32.totalorder %s51, 0
      %s54 = sadd.s32 %s53, 1
      %s55 = scalar_select %p52, %s53, %s54
      %p58 = pneg %p52
      %p59 = scmp.eq.s32.totalorder %s17, 1
      %p60 = por %p58, %p59
      %p61 = scmp.ne.s32.totalorder %s53, %s56
      %p62 = scmp.eq.s32.totalorder %s17, 0
      %p63 = por %p61, %p62
      %p64 = scmp.ne.s32.totalorder %s53, %s56
      %p65 = scmp.eq.s32.totalorder %s22, 1
      %p66 = por %p64, %p65
      %p67 = scmp.ne.s32.totalorder %s56, %s57
      %p68 = scmp.eq.s32.totalorder %s22, 0
      %p69 = por %p67, %p68
      %p70 = scmp.ne.s32.totalorder %s56, %s57
      %p71 = scmp.eq.s32.totalorder %s23, 1
      %p72 = por %p70, %p71
      %p74 = scmp.ne.s32.totalorder %s57, %s73
      %p75 = scmp.eq.s32.totalorder %s23, 0
      %p76 = por %p74, %p75
      %s77 = ssub.s32 %s17, %s24
      %p78 = scmp.eq.s32.totalorder %s77, 0
      %s80 = sadd.s32 %s79, 1
      %s81 = scalar_select %p78, %s79, %s80
      %p84 = pneg %p78
      %p85 = scmp.eq.s32.totalorder %s17, 1
      %p86 = por %p84, %p85
      %p87 = scmp.ne.s32.totalorder %s79, %s82
      %p88 = scmp.eq.s32.totalorder %s17, 0
      %p89 = por %p87, %p88
      %p90 = scmp.ne.s32.totalorder %s79, %s82
      %p91 = scmp.eq.s32.totalorder %s22, 1
      %p92 = por %p90, %p91
      %p93 = scmp.ne.s32.totalorder %s82, %s83
      %p94 = scmp.eq.s32.totalorder %s22, 0
      %p95 = por %p93, %p94
      %p96 = scmp.ne.s32.totalorder %s82, %s83
      %p97 = scmp.eq.s32.totalorder %s23, 1
      %p98 = por %p96, %p97
      %p100 = scmp.ne.s32.totalorder %s83, %s99
      %p101 = scmp.eq.s32.totalorder %s23, 0
      %p102 = por %p100, %p101
      %p103 = scmp.le.s32.totalorder 1, %s17
      %p104 = scmp.lt.s32.totalorder %s17, 3
      %p105 = pnand %p103, %p104
      %p106 = pneg %p105
      // Predicated region
      $region9: #{tpu_custom_call.1} parent=5 // pred_check
        _
      $region10: #{tpu_custom_call.1} parent=5 // pred_check_branch
        %108 = sbr.rel (%p105) target = $region12
      $region11: #{tpu_custom_call.1} parent=5 // pred_region
        %s109 = ssub.s32 %s17, 1
      $region12: #{tpu_custom_call.1} parent=5 // pred_fallthru
        _
      %p110 = scmp.lt.s32.totalorder %s17, 2
      // Predicated region
      $region13: #{tpu_custom_call.1} parent=5 // pred_check
        %p111 = pneg %p110
      $region14: #{tpu_custom_call.1} parent=5 // pred_check_branch
        %113 = sbr.rel (%p111) target = $region16
      $region15: #{tpu_custom_call.1} parent=5 // pred_region
        // Predicated region
        $region17: #{tpu_custom_call.1} parent=15 // pred_check
          %p114 = pneg %p37
        $region18: #{tpu_custom_call.1} parent=15 // pred_check_branch
          %116 = sbr.rel (%p114) target = $region20
        $region19: #{tpu_custom_call.1} parent=15 // pred_region
          %s117 = sand.u32 %s27, 1
          %s118 = scalar_lea.sflag [#allocation3], %s117
          %s119 = sand.u32 %s27, 1
          %s120 = smul.addr %s119, 128
          %s121 = scalar_lea.vmem [#allocation2], %s120
          %s122 = smul.u32 16, %s17
          %s124 = ssub.s32 2048, 2048
          %125 = vsyncadd %s118, %s124
          %s126 = smul.addr %s122, 128
          %s127 = scalar_lea.hbm %s0, %s126
          %s128 = sshll.u32 %s121, 4
          %s129 = int_to_ptr.vmem [resolvable:$true] %s128
          %134 = dma.hbm_to_vmem [thread:$0]  %s127, 2048, %s129, %s118, 128, 128, 8
        $region20: #{tpu_custom_call.1} parent=15 // pred_fallthru
          _
        // Predicated region
        $region21: #{tpu_custom_call.1} parent=15 // pred_check
          %p135 = pneg %p63
        $region22: #{tpu_custom_call.1} parent=15 // pred_check_branch
          %137 = sbr.rel (%p135) target = $region24
        $region23: #{tpu_custom_call.1} parent=15 // pred_region
          %s138 = sand.u32 %s53, 1
          %s139 = scalar_lea.sflag [#allocation6], %s138
          %s140 = sand.u32 %s53, 1
          %s141 = smul.addr %s140, 128
          %s142 = scalar_lea.vmem [#allocation5], %s141
          %s143 = smul.u32 16, %s17
          %s145 = ssub.s32 2048, 2048
          %146 = vsyncadd %s139, %s145
          %s147 = smul.addr %s143, 128
          %s148 = scalar_lea.hbm %s1, %s147
          %s149 = sshll.u32 %s142, 4
          %s150 = int_to_ptr.vmem [resolvable:$true] %s149
          %155 = dma.hbm_to_vmem [thread:$0]  %s148, 2048, %s150, %s139, 128, 128, 8
        $region24: #{tpu_custom_call.1} parent=15 // pred_fallthru
          _
      $region16: #{tpu_custom_call.1} parent=5 // pred_fallthru
        _
      %p156 = scmp.le.s32.totalorder 1, %s17
      %p157 = scmp.lt.s32.totalorder %s17, 3
      %p158 = pnand %p156, %p157
      %p159 = pneg %p158
      // Predicated region
      $region25: #{tpu_custom_call.1} parent=5 // pred_check
        _
      $region26: #{tpu_custom_call.1} parent=5 // pred_check_branch
        %161 = sbr.rel (%p158) target = $region28
      $region27: #{tpu_custom_call.1} parent=5 // pred_region
        %s162 = ssub.s32 %s17, 1
        %s163 = sand.u32 %s30, 1
        %s164 = scalar_lea.sflag [#allocation3], %s163
        %s165 = sand.u32 %s30, 1
        %s166 = smul.addr %s165, 128
        %s167 = scalar_lea.vmem [#allocation2], %s166
        // Predicated region
        $region29: #{tpu_custom_call.1} parent=27 // pred_check
          %p168 = pneg %p43
        $region30: #{tpu_custom_call.1} parent=27 // pred_check_branch
          %170 = sbr.rel (%p168) target = $region32
        $region31: #{tpu_custom_call.1} parent=27 // pred_region
          %171 = dma.done %s164, 2048
        $region32: #{tpu_custom_call.1} parent=27 // pred_fallthru
          _
        %s172 = sand.u32 %s56, 1
        %s173 = scalar_lea.sflag [#allocation6], %s172
        %s174 = sand.u32 %s56, 1
        %s175 = smul.addr %s174, 128
        %s176 = scalar_lea.vmem [#allocation5], %s175
        // Predicated region
        $region33: #{tpu_custom_call.1} parent=27 // pred_check
          %p177 = pneg %p69
        $region34: #{tpu_custom_call.1} parent=27 // pred_check_branch
          %179 = sbr.rel (%p177) target = $region36
        $region35: #{tpu_custom_call.1} parent=27 // pred_region
          %180 = dma.done %s173, 2048
        $region36: #{tpu_custom_call.1} parent=27 // pred_fallthru
          _
        %s181 = sand.u32 %s30, 1
        %s182 = scalar_lea.sflag [#allocation3], %s181
        %s183 = sand.u32 %s30, 1
        %s184 = smul.addr %s183, 128
        %s185 = scalar_lea.vmem [#allocation2], %s184
        %p186 = pneg %p43
        %p187 = pneg %p40
        %s188 = sand.u32 %s56, 1
        %s189 = scalar_lea.sflag [#allocation6], %s188
        %s190 = sand.u32 %s56, 1
        %s191 = smul.addr %s190, 128
        %s192 = scalar_lea.vmem [#allocation5], %s191
        %p193 = pneg %p69
        %p194 = pneg %p66
        %p195 = pneg %p95
        %p196 = pneg %p92
        %s197 = sand.u32 %s82, 1
        %s198 = scalar_lea.sflag [#allocation4], %s197
        %s199 = sand.u32 %s82, 1
        %s200 = smul.addr %s199, 8
        %s201 = scalar_lea.vmem [#allocation7], %s200
        %s202 = smul.u32 16, %s22
        %s203 = smul.u32 16, %s22
        %v204 = vld [vmem:[%s167] sm:$0xff]
        %v205 = vld [vmem:[%s167 + $0x8] sm:$0xff]
        %v206 = vld [vmem:[%s167 + $0x10] sm:$0xff]
        %v207 = vld [vmem:[%s167 + $0x18] sm:$0xff]
        %v208 = vld [vmem:[%s167 + $0x20] sm:$0xff]
        %v209 = vld [vmem:[%s167 + $0x28] sm:$0xff]
        %v210 = vld [vmem:[%s167 + $0x30] sm:$0xff]
        %v211 = vld [vmem:[%s167 + $0x38] sm:$0xff]
        %v212 = vld [vmem:[%s167 + $0x40] sm:$0xff]
        %v213 = vld [vmem:[%s167 + $0x48] sm:$0xff]
        %v214 = vld [vmem:[%s167 + $0x50] sm:$0xff]
        %v215 = vld [vmem:[%s167 + $0x58] sm:$0xff]
        %v216 = vld [vmem:[%s167 + $0x60] sm:$0xff]
        %v217 = vld [vmem:[%s167 + $0x68] sm:$0xff]
        %v218 = vld [vmem:[%s167 + $0x70] sm:$0xff]
        %v219 = vld [vmem:[%s167 + $0x78] sm:$0xff]
        %v220 = vld [vmem:[%s176] sm:$0xff]
        %v221 = vld [vmem:[%s176 + $0x8] sm:$0xff]
        %v222 = vld [vmem:[%s176 + $0x10] sm:$0xff]
        %v223 = vld [vmem:[%s176 + $0x18] sm:$0xff]
        %v224 = vld [vmem:[%s176 + $0x20] sm:$0xff]
        %v225 = vld [vmem:[%s176 + $0x28] sm:$0xff]
        %v226 = vld [vmem:[%s176 + $0x30] sm:$0xff]
        %v227 = vld [vmem:[%s176 + $0x38] sm:$0xff]
        %v228 = vld [vmem:[%s176 + $0x40] sm:$0xff]
        %v229 = vld [vmem:[%s176 + $0x48] sm:$0xff]
        %v230 = vld [vmem:[%s176 + $0x50] sm:$0xff]
        %v231 = vld [vmem:[%s176 + $0x58] sm:$0xff]
        %v232 = vld [vmem:[%s176 + $0x60] sm:$0xff]
        %v233 = vld [vmem:[%s176 + $0x68] sm:$0xff]
        %v234 = vld [vmem:[%s176 + $0x70] sm:$0xff]
        %v235 = vld [vmem:[%s176 + $0x78] sm:$0xff]
        %v236 = vlaneseq
        %v237 = vand.u32 %v236, 127
        %v238 = vand.u32 %v237, 31
        %v239 = vadd.s32 %v238, 1
        %vm240 = vcmp.lt.s32.totalorder %v239, 32
        %241 = vrot.lane.b32.xlu0 %v204, 127
        %v242 = vpop.permute.xlu0 %241
        %243 = vrot.lane.b32.xlu0 %v205, 127
        %v244 = vpop.permute.xlu0 %243
        %245 = vrot.lane.b32.xlu0 %v206, 127
        %v246 = vpop.permute.xlu0 %245
        %247 = vrot.lane.b32.xlu0 %v207, 127
        %v248 = vpop.permute.xlu0 %247
        %249 = vrot.lane.b32.xlu0 %v208, 127
        %v250 = vpop.permute.xlu0 %249
        %251 = vrot.lane.b32.xlu0 %v209, 127
        %v252 = vpop.permute.xlu0 %251
        %253 = vrot.lane.b32.xlu0 %v210, 127
        %v254 = vpop.permute.xlu0 %253
        %255 = vrot.lane.b32.xlu0 %v211, 127
        %v256 = vpop.permute.xlu0 %255
        %257 = vrot.lane.b32.xlu0 %v212, 127
        %v258 = vpop.permute.xlu0 %257
        %259 = vrot.lane.b32.xlu0 %v213, 127
        %v260 = vpop.permute.xlu0 %259
        %261 = vrot.lane.b32.xlu0 %v214, 127
        %v262 = vpop.permute.xlu0 %261
        %263 = vrot.lane.b32.xlu0 %v215, 127
        %v264 = vpop.permute.xlu0 %263
        %265 = vrot.lane.b32.xlu0 %v216, 127
        %v266 = vpop.permute.xlu0 %265
        %267 = vrot.lane.b32.xlu0 %v217, 127
        %v268 = vpop.permute.xlu0 %267
        %269 = vrot.lane.b32.xlu0 %v218, 127
        %v270 = vpop.permute.xlu0 %269
        %271 = vrot.lane.b32.xlu0 %v219, 127
        %v272 = vpop.permute.xlu0 %271
        %273 = vrot.lane.b32.xlu0 %v238, 127
        %v274 = vpop.permute.xlu0 %273
        %vm275 = vcmp.gt.f32.partialorder %v242, %v204
        %vm276 = vcmp.gt.f32.partialorder %v244, %v205
        %vm277 = vcmp.gt.f32.partialorder %v246, %v206
        %vm278 = vcmp.gt.f32.partialorder %v248, %v207
        %vm279 = vcmp.gt.f32.partialorder %v250, %v208
        %vm280 = vcmp.gt.f32.partialorder %v252, %v209
        %vm281 = vcmp.gt.f32.partialorder %v254, %v210
        %vm282 = vcmp.gt.f32.partialorder %v256, %v211
        %vm283 = vcmp.gt.f32.partialorder %v258, %v212
        %vm284 = vcmp.gt.f32.partialorder %v260, %v213
        %vm285 = vcmp.gt.f32.partialorder %v262, %v214
        %vm286 = vcmp.gt.f32.partialorder %v264, %v215
        %vm287 = vcmp.gt.f32.partialorder %v266, %v216
        %vm288 = vcmp.gt.f32.partialorder %v268, %v217
        %vm289 = vcmp.gt.f32.partialorder %v270, %v218
        %vm290 = vcmp.gt.f32.partialorder %v272, %v219
        %vm291 = vmand %vm240, %vm275
        %vm292 = vmand %vm240, %vm276
        %vm293 = vmand %vm240, %vm277
        %vm294 = vmand %vm240, %vm278
        %vm295 = vmand %vm240, %vm279
        %vm296 = vmand %vm240, %vm280
        %vm297 = vmand %vm240, %vm281
        %vm298 = vmand %vm240, %vm282
        %vm299 = vmand %vm240, %vm283
        %vm300 = vmand %vm240, %vm284
        %vm301 = vmand %vm240, %vm285
        %vm302 = vmand %vm240, %vm286
        %vm303 = vmand %vm240, %vm287
        %vm304 = vmand %vm240, %vm288
        %vm305 = vmand %vm240, %vm289
        %vm306 = vmand %vm240, %vm290
        %v307 = vsel %vm291, %v242, %v204
        %v308 = vsel %vm292, %v244, %v205
        %v309 = vsel %vm293, %v246, %v206
        %v310 = vsel %vm294, %v248, %v207
        %v311 = vsel %vm295, %v250, %v208
        %v312 = vsel %vm296, %v252, %v209
        %v313 = vsel %vm297, %v254, %v210
        %v314 = vsel %vm298, %v256, %v211
        %v315 = vsel %vm299, %v258, %v212
        %v316 = vsel %vm300, %v260, %v213
        %v317 = vsel %vm301, %v262, %v214
        %v318 = vsel %vm302, %v264, %v215
        %v319 = vsel %vm303, %v266, %v216
        %v320 = vsel %vm304, %v268, %v217
        %v321 = vsel %vm305, %v270, %v218
        %v322 = vsel %vm306, %v272, %v219
        %v323 = vsel %vm291, %v274, %v238
        %v324 = vsel %vm292, %v274, %v238
        %v325 = vsel %vm293, %v274, %v238
        %v326 = vsel %vm294, %v274, %v238
        %v327 = vsel %vm295, %v274, %v238
        %v328 = vsel %vm296, %v274, %v238
        %v329 = vsel %vm297, %v274, %v238
        %v330 = vsel %vm298, %v274, %v238
        %v331 = vsel %vm299, %v274, %v238
        %v332 = vsel %vm300, %v274, %v238
        %v333 = vsel %vm301, %v274, %v238
        %v334 = vsel %vm302, %v274, %v238
        %v335 = vsel %vm303, %v274, %v238
        %v336 = vsel %vm304, %v274, %v238
        %v337 = vsel %vm305, %v274, %v238
        %v338 = vsel %vm306, %v274, %v238
        %339 = vrot.lane.b32.xlu0 %v220, 127
        %v340 = vpop.permute.xlu0 %339
        %341 = vrot.lane.b32.xlu0 %v221, 127
        %v342 = vpop.permute.xlu0 %341
        %343 = vrot.lane.b32.xlu0 %v222, 127
        %v344 = vpop.permute.xlu0 %343
        %345 = vrot.lane.b32.xlu0 %v223, 127
        %v346 = vpop.permute.xlu0 %345
        %347 = vrot.lane.b32.xlu0 %v224, 127
        %v348 = vpop.permute.xlu0 %347
        %349 = vrot.lane.b32.xlu0 %v225, 127
        %v350 = vpop.permute.xlu0 %349
        %351 = vrot.lane.b32.xlu0 %v226, 127
        %v352 = vpop.permute.xlu0 %351
        %353 = vrot.lane.b32.xlu0 %v227, 127
        %v354 = vpop.permute.xlu0 %353
        %355 = vrot.lane.b32.xlu0 %v228, 127
        %v356 = vpop.permute.xlu0 %355
        %357 = vrot.lane.b32.xlu0 %v229, 127
        %v358 = vpop.permute.xlu0 %357
        %359 = vrot.lane.b32.xlu0 %v230, 127
        %v360 = vpop.permute.xlu0 %359
        %361 = vrot.lane.b32.xlu0 %v231, 127
        %v362 = vpop.permute.xlu0 %361
        %363 = vrot.lane.b32.xlu0 %v232, 127
        %v364 = vpop.permute.xlu0 %363
        %365 = vrot.lane.b32.xlu0 %v233, 127
        %v366 = vpop.permute.xlu0 %365
        %367 = vrot.lane.b32.xlu0 %v234, 127
        %v368 = vpop.permute.xlu0 %367
        %369 = vrot.lane.b32.xlu0 %v235, 127
        %v370 = vpop.permute.xlu0 %369
        %vm371 = vcmp.gt.f32.partialorder %v340, %v220
        %vm372 = vcmp.gt.f32.partialorder %v342, %v221
        %vm373 = vcmp.gt.f32.partialorder %v344, %v222
        %vm374 = vcmp.gt.f32.partialorder %v346, %v223
        %vm375 = vcmp.gt.f32.partialorder %v348, %v224
        %vm376 = vcmp.gt.f32.partialorder %v350, %v225
        %vm377 = vcmp.gt.f32.partialorder %v352, %v226
        %vm378 = vcmp.gt.f32.partialorder %v354, %v227
        %vm379 = vcmp.gt.f32.partialorder %v356, %v228
        %vm380 = vcmp.gt.f32.partialorder %v358, %v229
        %vm381 = vcmp.gt.f32.partialorder %v360, %v230
        %vm382 = vcmp.gt.f32.partialorder %v362, %v231
        %vm383 = vcmp.gt.f32.partialorder %v364, %v232
        %vm384 = vcmp.gt.f32.partialorder %v366, %v233
        %vm385 = vcmp.gt.f32.partialorder %v368, %v234
        %vm386 = vcmp.gt.f32.partialorder %v370, %v235
        %vm387 = vmand %vm240, %vm371
        %vm388 = vmand %vm240, %vm372
        %vm389 = vmand %vm240, %vm373
        %vm390 = vmand %vm240, %vm374
        %vm391 = vmand %vm240, %vm375
        %vm392 = vmand %vm240, %vm376
        %vm393 = vmand %vm240, %vm377
        %vm394 = vmand %vm240, %vm378
        %vm395 = vmand %vm240, %vm379
        %vm396 = vmand %vm240, %vm380
        %vm397 = vmand %vm240, %vm381
        %vm398 = vmand %vm240, %vm382
        %vm399 = vmand %vm240, %vm383
        %vm400 = vmand %vm240, %vm384
        %vm401 = vmand %vm240, %vm385
        %vm402 = vmand %vm240, %vm386
        %v403 = vsel %vm387, %v340, %v220
        %v404 = vsel %vm388, %v342, %v221
        %v405 = vsel %vm389, %v344, %v222
        %v406 = vsel %vm390, %v346, %v223
        %v407 = vsel %vm391, %v348, %v224
        %v408 = vsel %vm392, %v350, %v225
        %v409 = vsel %vm393, %v352, %v226
        %v410 = vsel %vm394, %v354, %v227
        %v411 = vsel %vm395, %v356, %v228
        %v412 = vsel %vm396, %v358, %v229
        %v413 = vsel %vm397, %v360, %v230
        %v414 = vsel %vm398, %v362, %v231
        %v415 = vsel %vm399, %v364, %v232
        %v416 = vsel %vm400, %v366, %v233
        %v417 = vsel %vm401, %v368, %v234
        %v418 = vsel %vm402, %v370, %v235
        %v419 = vsel %vm387, %v274, %v238
        %v420 = vsel %vm388, %v274, %v238
        %v421 = vsel %vm389, %v274, %v238
        %v422 = vsel %vm390, %v274, %v238
        %v423 = vsel %vm391, %v274, %v238
        %v424 = vsel %vm392, %v274, %v238
        %v425 = vsel %vm393, %v274, %v238
        %v426 = vsel %vm394, %v274, %v238
        %v427 = vsel %vm395, %v274, %v238
        %v428 = vsel %vm396, %v274, %v238
        %v429 = vsel %vm397, %v274, %v238
        %v430 = vsel %vm398, %v274, %v238
        %v431 = vsel %vm399, %v274, %v238
        %v432 = vsel %vm400, %v274, %v238
        %v433 = vsel %vm401, %v274, %v238
        %v434 = vsel %vm402, %v274, %v238
        %v435 = vadd.s32 %v238, 2
        %vm436 = vcmp.lt.s32.totalorder %v435, 32
        %437 = vrot.lane.b32.xlu0 %v307, 126
        %v438 = vpop.permute.xlu0 %437
        %439 = vrot.lane.b32.xlu0 %v308, 126
        %v440 = vpop.permute.xlu0 %439
        %441 = vrot.lane.b32.xlu0 %v309, 126
        %v442 = vpop.permute.xlu0 %441
        %443 = vrot.lane.b32.xlu0 %v310, 126
        %v444 = vpop.permute.xlu0 %443
        %445 = vrot.lane.b32.xlu0 %v311, 126
        %v446 = vpop.permute.xlu0 %445
        %447 = vrot.lane.b32.xlu0 %v312, 126
        %v448 = vpop.permute.xlu0 %447
        %449 = vrot.lane.b32.xlu0 %v313, 126
        %v450 = vpop.permute.xlu0 %449
        %451 = vrot.lane.b32.xlu0 %v314, 126
        %v452 = vpop.permute.xlu0 %451
        %453 = vrot.lane.b32.xlu0 %v315, 126
        %v454 = vpop.permute.xlu0 %453
        %455 = vrot.lane.b32.xlu0 %v316, 126
        %v456 = vpop.permute.xlu0 %455
        %457 = vrot.lane.b32.xlu0 %v317, 126
        %v458 = vpop.permute.xlu0 %457
        %459 = vrot.lane.b32.xlu0 %v318, 126
        %v460 = vpop.permute.xlu0 %459
        %461 = vrot.lane.b32.xlu0 %v319, 126
        %v462 = vpop.permute.xlu0 %461
        %463 = vrot.lane.b32.xlu0 %v320, 126
        %v464 = vpop.permute.xlu0 %463
        %465 = vrot.lane.b32.xlu0 %v321, 126
        %v466 = vpop.permute.xlu0 %465
        %467 = vrot.lane.b32.xlu0 %v322, 126
        %v468 = vpop.permute.xlu0 %467
        %469 = vrot.lane.b32.xlu0 %v323, 126
        %v470 = vpop.permute.xlu0 %469
        %471 = vrot.lane.b32.xlu0 %v324, 126
        %v472 = vpop.permute.xlu0 %471
        %473 = vrot.lane.b32.xlu0 %v325, 126
        %v474 = vpop.permute.xlu0 %473
        %475 = vrot.lane.b32.xlu0 %v326, 126
        %v476 = vpop.permute.xlu0 %475
        %477 = vrot.lane.b32.xlu0 %v327, 126
        %v478 = vpop.permute.xlu0 %477
        %479 = vrot.lane.b32.xlu0 %v328, 126
        %v480 = vpop.permute.xlu0 %479
        %481 = vrot.lane.b32.xlu0 %v329, 126
        %v482 = vpop.permute.xlu0 %481
        %483 = vrot.lane.b32.xlu0 %v330, 126
        %v484 = vpop.permute.xlu0 %483
        %485 = vrot.lane.b32.xlu0 %v331, 126
        %v486 = vpop.permute.xlu0 %485
        %487 = vrot.lane.b32.xlu0 %v332, 126
        %v488 = vpop.permute.xlu0 %487
        %489 = vrot.lane.b32.xlu0 %v333, 126
        %v490 = vpop.permute.xlu0 %489
        %491 = vrot.lane.b32.xlu0 %v334, 126
        %v492 = vpop.permute.xlu0 %491
        %493 = vrot.lane.b32.xlu0 %v335, 126
        %v494 = vpop.permute.xlu0 %493
        %495 = vrot.lane.b32.xlu0 %v336, 126
        %v496 = vpop.permute.xlu0 %495
        %497 = vrot.lane.b32.xlu0 %v337, 126
        %v498 = vpop.permute.xlu0 %497
        %499 = vrot.lane.b32.xlu0 %v338, 126
        %v500 = vpop.permute.xlu0 %499
        %vm501 = vcmp.gt.f32.partialorder %v438, %v307
        %vm502 = vcmp.gt.f32.partialorder %v440, %v308
        %vm503 = vcmp.gt.f32.partialorder %v442, %v309
        %vm504 = vcmp.gt.f32.partialorder %v444, %v310
        %vm505 = vcmp.gt.f32.partialorder %v446, %v311
        %vm506 = vcmp.gt.f32.partialorder %v448, %v312
        %vm507 = vcmp.gt.f32.partialorder %v450, %v313
        %vm508 = vcmp.gt.f32.partialorder %v452, %v314
        %vm509 = vcmp.gt.f32.partialorder %v454, %v315
        %vm510 = vcmp.gt.f32.partialorder %v456, %v316
        %vm511 = vcmp.gt.f32.partialorder %v458, %v317
        %vm512 = vcmp.gt.f32.partialorder %v460, %v318
        %vm513 = vcmp.gt.f32.partialorder %v462, %v319
        %vm514 = vcmp.gt.f32.partialorder %v464, %v320
        %vm515 = vcmp.gt.f32.partialorder %v466, %v321
        %vm516 = vcmp.gt.f32.partialorder %v468, %v322
        %vm517 = vmand %vm436, %vm501
        %vm518 = vmand %vm436, %vm502
        %vm519 = vmand %vm436, %vm503
        %vm520 = vmand %vm436, %vm504
        %vm521 = vmand %vm436, %vm505
        %vm522 = vmand %vm436, %vm506
        %vm523 = vmand %vm436, %vm507
        %vm524 = vmand %vm436, %vm508
        %vm525 = vmand %vm436, %vm509
        %vm526 = vmand %vm436, %vm510
        %vm527 = vmand %vm436, %vm511
        %vm528 = vmand %vm436, %vm512
        %vm529 = vmand %vm436, %vm513
        %vm530 = vmand %vm436, %vm514
        %vm531 = vmand %vm436, %vm515
        %vm532 = vmand %vm436, %vm516
        %v533 = vsel %vm517, %v438, %v307
        %v534 = vsel %vm518, %v440, %v308
        %v535 = vsel %vm519, %v442, %v309
        %v536 = vsel %vm520, %v444, %v310
        %v537 = vsel %vm521, %v446, %v311
        %v538 = vsel %vm522, %v448, %v312
        %v539 = vsel %vm523, %v450, %v313
        %v540 = vsel %vm524, %v452, %v314
        %v541 = vsel %vm525, %v454, %v315
        %v542 = vsel %vm526, %v456, %v316
        %v543 = vsel %vm527, %v458, %v317
        %v544 = vsel %vm528, %v460, %v318
        %v545 = vsel %vm529, %v462, %v319
        %v546 = vsel %vm530, %v464, %v320
        %v547 = vsel %vm531, %v466, %v321
        %v548 = vsel %vm532, %v468, %v322
        %v549 = vsel %vm517, %v470, %v323
        %v550 = vsel %vm518, %v472, %v324
        %v551 = vsel %vm519, %v474, %v325
        %v552 = vsel %vm520, %v476, %v326
        %v553 = vsel %vm521, %v478, %v327
        %v554 = vsel %vm522, %v480, %v328
        %v555 = vsel %vm523, %v482, %v329
        %v556 = vsel %vm524, %v484, %v330
        %v557 = vsel %vm525, %v486, %v331
        %v558 = vsel %vm526, %v488, %v332
        %v559 = vsel %vm527, %v490, %v333
        %v560 = vsel %vm528, %v492, %v334
        %v561 = vsel %vm529, %v494, %v335
        %v562 = vsel %vm530, %v496, %v336
        %v563 = vsel %vm531, %v498, %v337
        %v564 = vsel %vm532, %v500, %v338
        %565 = vrot.lane.b32.xlu0 %v403, 126
        %v566 = vpop.permute.xlu0 %565
        %567 = vrot.lane.b32.xlu0 %v404, 126
        %v568 = vpop.permute.xlu0 %567
        %569 = vrot.lane.b32.xlu0 %v405, 126
        %v570 = vpop.permute.xlu0 %569
        %571 = vrot.lane.b32.xlu0 %v406, 126
        %v572 = vpop.permute.xlu0 %571
        %573 = vrot.lane.b32.xlu0 %v407, 126
        %v574 = vpop.permute.xlu0 %573
        %575 = vrot.lane.b32.xlu0 %v408, 126
        %v576 = vpop.permute.xlu0 %575
        %577 = vrot.lane.b32.xlu0 %v409, 126
        %v578 = vpop.permute.xlu0 %577
        %579 = vrot.lane.b32.xlu0 %v410, 126
        %v580 = vpop.permute.xlu0 %579
        %581 = vrot.lane.b32.xlu0 %v411, 126
        %v582 = vpop.permute.xlu0 %581
        %583 = vrot.lane.b32.xlu0 %v412, 126
        %v584 = vpop.permute.xlu0 %583
        %585 = vrot.lane.b32.xlu0 %v413, 126
        %v586 = vpop.permute.xlu0 %585
        %587 = vrot.lane.b32.xlu0 %v414, 126
        %v588 = vpop.permute.xlu0 %587
        %589 = vrot.lane.b32.xlu0 %v415, 126
        %v590 = vpop.permute.xlu0 %589
        %591 = vrot.lane.b32.xlu0 %v416, 126
        %v592 = vpop.permute.xlu0 %591
        %593 = vrot.lane.b32.xlu0 %v417, 126
        %v594 = vpop.permute.xlu0 %593
        %595 = vrot.lane.b32.xlu0 %v418, 126
        %v596 = vpop.permute.xlu0 %595
        %597 = vrot.lane.b32.xlu0 %v419, 126
        %v598 = vpop.permute.xlu0 %597
        %599 = vrot.lane.b32.xlu0 %v420, 126
        %v600 = vpop.permute.xlu0 %599
        %601 = vrot.lane.b32.xlu0 %v421, 126
        %v602 = vpop.permute.xlu0 %601
        %603 = vrot.lane.b32.xlu0 %v422, 126
        %v604 = vpop.permute.xlu0 %603
        %605 = vrot.lane.b32.xlu0 %v423, 126
        %v606 = vpop.permute.xlu0 %605
        %607 = vrot.lane.b32.xlu0 %v424, 126
        %v608 = vpop.permute.xlu0 %607
        %609 = vrot.lane.b32.xlu0 %v425, 126
        %v610 = vpop.permute.xlu0 %609
        %611 = vrot.lane.b32.xlu0 %v426, 126
        %v612 = vpop.permute.xlu0 %611
        %613 = vrot.lane.b32.xlu0 %v427, 126
        %v614 = vpop.permute.xlu0 %613
        %615 = vrot.lane.b32.xlu0 %v428, 126
        %v616 = vpop.permute.xlu0 %615
        %617 = vrot.lane.b32.xlu0 %v429, 126
        %v618 = vpop.permute.xlu0 %617
        %619 = vrot.lane.b32.xlu0 %v430, 126
        %v620 = vpop.permute.xlu0 %619
        %621 = vrot.lane.b32.xlu0 %v431, 126
        %v622 = vpop.permute.xlu0 %621
        %623 = vrot.lane.b32.xlu0 %v432, 126
        %v624 = vpop.permute.xlu0 %623
        %625 = vrot.lane.b32.xlu0 %v433, 126
        %v626 = vpop.permute.xlu0 %625
        %627 = vrot.lane.b32.xlu0 %v434, 126
        %v628 = vpop.permute.xlu0 %627
        %vm629 = vcmp.gt.f32.partialorder %v566, %v403
        %vm630 = vcmp.gt.f32.partialorder %v568, %v404
        %vm631 = vcmp.gt.f32.partialorder %v570, %v405
        %vm632 = vcmp.gt.f32.partialorder %v572, %v406
        %vm633 = vcmp.gt.f32.partialorder %v574, %v407
        %vm634 = vcmp.gt.f32.partialorder %v576, %v408
        %vm635 = vcmp.gt.f32.partialorder %v578, %v409
        %vm636 = vcmp.gt.f32.partialorder %v580, %v410
        %vm637 = vcmp.gt.f32.partialorder %v582, %v411
        %vm638 = vcmp.gt.f32.partialorder %v584, %v412
        %vm639 = vcmp.gt.f32.partialorder %v586, %v413
        %vm640 = vcmp.gt.f32.partialorder %v588, %v414
        %vm641 = vcmp.gt.f32.partialorder %v590, %v415
        %vm642 = vcmp.gt.f32.partialorder %v592, %v416
        %vm643 = vcmp.gt.f32.partialorder %v594, %v417
        %vm644 = vcmp.gt.f32.partialorder %v596, %v418
        %vm645 = vmand %vm436, %vm629
        %vm646 = vmand %vm436, %vm630
        %vm647 = vmand %vm436, %vm631
        %vm648 = vmand %vm436, %vm632
        %vm649 = vmand %vm436, %vm633
        %vm650 = vmand %vm436, %vm634
        %vm651 = vmand %vm436, %vm635
        %vm652 = vmand %vm436, %vm636
        %vm653 = vmand %vm436, %vm637
        %vm654 = vmand %vm436, %vm638
        %vm655 = vmand %vm436, %vm639
        %vm656 = vmand %vm436, %vm640
        %vm657 = vmand %vm436, %vm641
        %vm658 = vmand %vm436, %vm642
        %vm659 = vmand %vm436, %vm643
        %vm660 = vmand %vm436, %vm644
        %v661 = vsel %vm645, %v566, %v403
        %v662 = vsel %vm646, %v568, %v404
        %v663 = vsel %vm647, %v570, %v405
        %v664 = vsel %vm648, %v572, %v406
        %v665 = vsel %vm649, %v574, %v407
        %v666 = vsel %vm650, %v576, %v408
        %v667 = vsel %vm651, %v578, %v409
        %v668 = vsel %vm652, %v580, %v410
        %v669 = vsel %vm653, %v582, %v411
        %v670 = vsel %vm654, %v584, %v412
        %v671 = vsel %vm655, %v586, %v413
        %v672 = vsel %vm656, %v588, %v414
        %v673 = vsel %vm657, %v590, %v415
        %v674 = vsel %vm658, %v592, %v416
        %v675 = vsel %vm659, %v594, %v417
        %v676 = vsel %vm660, %v596, %v418
        %v677 = vsel %vm645, %v598, %v419
        %v678 = vsel %vm646, %v600, %v420
        %v679 = vsel %vm647, %v602, %v421
        %v680 = vsel %vm648, %v604, %v422
        %v681 = vsel %vm649, %v606, %v423
        %v682 = vsel %vm650, %v608, %v424
        %v683 = vsel %vm651, %v610, %v425
        %v684 = vsel %vm652, %v612, %v426
        %v685 = vsel %vm653, %v614, %v427
        %v686 = vsel %vm654, %v616, %v428
        %v687 = vsel %vm655, %v618, %v429
        %v688 = vsel %vm656, %v620, %v430
        %v689 = vsel %vm657, %v622, %v431
        %v690 = vsel %vm658, %v624, %v432
        %v691 = vsel %vm659, %v626, %v433
        %v692 = vsel %vm660, %v628, %v434
        %v693 = vadd.s32 %v238, 4
        %vm694 = vcmp.lt.s32.totalorder %v693, 32
        %695 = vrot.lane.b32.xlu0 %v533, 124
        %v696 = vpop.permute.xlu0 %695
        %697 = vrot.lane.b32.xlu0 %v534, 124
        %v698 = vpop.permute.xlu0 %697
        %699 = vrot.lane.b32.xlu0 %v535, 124
        %v700 = vpop.permute.xlu0 %699
        %701 = vrot.lane.b32.xlu0 %v536, 124
        %v702 = vpop.permute.xlu0 %701
        %703 = vrot.lane.b32.xlu0 %v537, 124
        %v704 = vpop.permute.xlu0 %703
        %705 = vrot.lane.b32.xlu0 %v538, 124
        %v706 = vpop.permute.xlu0 %705
        %707 = vrot.lane.b32.xlu0 %v539, 124
        %v708 = vpop.permute.xlu0 %707
        %709 = vrot.lane.b32.xlu0 %v540, 124
        %v710 = vpop.permute.xlu0 %709
        %711 = vrot.lane.b32.xlu0 %v541, 124
        %v712 = vpop.permute.xlu0 %711
        %713 = vrot.lane.b32.xlu0 %v542, 124
        %v714 = vpop.permute.xlu0 %713
        %715 = vrot.lane.b32.xlu0 %v543, 124
        %v716 = vpop.permute.xlu0 %715
        %717 = vrot.lane.b32.xlu0 %v544, 124
        %v718 = vpop.permute.xlu0 %717
        %719 = vrot.lane.b32.xlu0 %v545, 124
        %v720 = vpop.permute.xlu0 %719
        %721 = vrot.lane.b32.xlu0 %v546, 124
        %v722 = vpop.permute.xlu0 %721
        %723 = vrot.lane.b32.xlu0 %v547, 124
        %v724 = vpop.permute.xlu0 %723
        %725 = vrot.lane.b32.xlu0 %v548, 124
        %v726 = vpop.permute.xlu0 %725
        %727 = vrot.lane.b32.xlu0 %v549, 124
        %v728 = vpop.permute.xlu0 %727
        %729 = vrot.lane.b32.xlu0 %v550, 124
        %v730 = vpop.permute.xlu0 %729
        %731 = vrot.lane.b32.xlu0 %v551, 124
        %v732 = vpop.permute.xlu0 %731
        %733 = vrot.lane.b32.xlu0 %v552, 124
        %v734 = vpop.permute.xlu0 %733
        %735 = vrot.lane.b32.xlu0 %v553, 124
        %v736 = vpop.permute.xlu0 %735
        %737 = vrot.lane.b32.xlu0 %v554, 124
        %v738 = vpop.permute.xlu0 %737
        %739 = vrot.lane.b32.xlu0 %v555, 124
        %v740 = vpop.permute.xlu0 %739
        %741 = vrot.lane.b32.xlu0 %v556, 124
        %v742 = vpop.permute.xlu0 %741
        %743 = vrot.lane.b32.xlu0 %v557, 124
        %v744 = vpop.permute.xlu0 %743
        %745 = vrot.lane.b32.xlu0 %v558, 124
        %v746 = vpop.permute.xlu0 %745
        %747 = vrot.lane.b32.xlu0 %v559, 124
        %v748 = vpop.permute.xlu0 %747
        %749 = vrot.lane.b32.xlu0 %v560, 124
        %v750 = vpop.permute.xlu0 %749
        %751 = vrot.lane.b32.xlu0 %v561, 124
        %v752 = vpop.permute.xlu0 %751
        %753 = vrot.lane.b32.xlu0 %v562, 124
        %v754 = vpop.permute.xlu0 %753
        %755 = vrot.lane.b32.xlu0 %v563, 124
        %v756 = vpop.permute.xlu0 %755
        %757 = vrot.lane.b32.xlu0 %v564, 124
        %v758 = vpop.permute.xlu0 %757
        %vm759 = vcmp.gt.f32.partialorder %v696, %v533
        %vm760 = vcmp.gt.f32.partialorder %v698, %v534
        %vm761 = vcmp.gt.f32.partialorder %v700, %v535
        %vm762 = vcmp.gt.f32.partialorder %v702, %v536
        %vm763 = vcmp.gt.f32.partialorder %v704, %v537
        %vm764 = vcmp.gt.f32.partialorder %v706, %v538
        %vm765 = vcmp.gt.f32.partialorder %v708, %v539
        %vm766 = vcmp.gt.f32.partialorder %v710, %v540
        %vm767 = vcmp.gt.f32.partialorder %v712, %v541
        %vm768 = vcmp.gt.f32.partialorder %v714, %v542
        %vm769 = vcmp.gt.f32.partialorder %v716, %v543
        %vm770 = vcmp.gt.f32.partialorder %v718, %v544
        %vm771 = vcmp.gt.f32.partialorder %v720, %v545
        %vm772 = vcmp.gt.f32.partialorder %v722, %v546
        %vm773 = vcmp.gt.f32.partialorder %v724, %v547
        %vm774 = vcmp.gt.f32.partialorder %v726, %v548
        %vm775 = vmand %vm694, %vm759
        %vm776 = vmand %vm694, %vm760
        %vm777 = vmand %vm694, %vm761
        %vm778 = vmand %vm694, %vm762
        %vm779 = vmand %vm694, %vm763
        %vm780 = vmand %vm694, %vm764
        %vm781 = vmand %vm694, %vm765
        %vm782 = vmand %vm694, %vm766
        %vm783 = vmand %vm694, %vm767
        %vm784 = vmand %vm694, %vm768
        %vm785 = vmand %vm694, %vm769
        %vm786 = vmand %vm694, %vm770
        %vm787 = vmand %vm694, %vm771
        %vm788 = vmand %vm694, %vm772
        %vm789 = vmand %vm694, %vm773
        %vm790 = vmand %vm694, %vm774
        %v791 = vsel %vm775, %v696, %v533
        %v792 = vsel %vm776, %v698, %v534
        %v793 = vsel %vm777, %v700, %v535
        %v794 = vsel %vm778, %v702, %v536
        %v795 = vsel %vm779, %v704, %v537
        %v796 = vsel %vm780, %v706, %v538
        %v797 = vsel %vm781, %v708, %v539
        %v798 = vsel %vm782, %v710, %v540
        %v799 = vsel %vm783, %v712, %v541
        %v800 = vsel %vm784, %v714, %v542
        %v801 = vsel %vm785, %v716, %v543
        %v802 = vsel %vm786, %v718, %v544
        %v803 = vsel %vm787, %v720, %v545
        %v804 = vsel %vm788, %v722, %v546
        %v805 = vsel %vm789, %v724, %v547
        %v806 = vsel %vm790, %v726, %v548
        %v807 = vsel %vm775, %v728, %v549
        %v808 = vsel %vm776, %v730, %v550
        %v809 = vsel %vm777, %v732, %v551
        %v810 = vsel %vm778, %v734, %v552
        %v811 = vsel %vm779, %v736, %v553
        %v812 = vsel %vm780, %v738, %v554
        %v813 = vsel %vm781, %v740, %v555
        %v814 = vsel %vm782, %v742, %v556
        %v815 = vsel %vm783, %v744, %v557
        %v816 = vsel %vm784, %v746, %v558
        %v817 = vsel %vm785, %v748, %v559
        %v818 = vsel %vm786, %v750, %v560
        %v819 = vsel %vm787, %v752, %v561
        %v820 = vsel %vm788, %v754, %v562
        %v821 = vsel %vm789, %v756, %v563
        %v822 = vsel %vm790, %v758, %v564
        %823 = vrot.lane.b32.xlu0 %v661, 124
        %v824 = vpop.permute.xlu0 %823
        %825 = vrot.lane.b32.xlu0 %v662, 124
        %v826 = vpop.permute.xlu0 %825
        %827 = vrot.lane.b32.xlu0 %v663, 124
        %v828 = vpop.permute.xlu0 %827
        %829 = vrot.lane.b32.xlu0 %v664, 124
        %v830 = vpop.permute.xlu0 %829
        %831 = vrot.lane.b32.xlu0 %v665, 124
        %v832 = vpop.permute.xlu0 %831
        %833 = vrot.lane.b32.xlu0 %v666, 124
        %v834 = vpop.permute.xlu0 %833
        %835 = vrot.lane.b32.xlu0 %v667, 124
        %v836 = vpop.permute.xlu0 %835
        %837 = vrot.lane.b32.xlu0 %v668, 124
        %v838 = vpop.permute.xlu0 %837
        %839 = vrot.lane.b32.xlu0 %v669, 124
        %v840 = vpop.permute.xlu0 %839
        %841 = vrot.lane.b32.xlu0 %v670, 124
        %v842 = vpop.permute.xlu0 %841
        %843 = vrot.lane.b32.xlu0 %v671, 124
        %v844 = vpop.permute.xlu0 %843
        %845 = vrot.lane.b32.xlu0 %v672, 124
        %v846 = vpop.permute.xlu0 %845
        %847 = vrot.lane.b32.xlu0 %v673, 124
        %v848 = vpop.permute.xlu0 %847
        %849 = vrot.lane.b32.xlu0 %v674, 124
        %v850 = vpop.permute.xlu0 %849
        %851 = vrot.lane.b32.xlu0 %v675, 124
        %v852 = vpop.permute.xlu0 %851
        %853 = vrot.lane.b32.xlu0 %v676, 124
        %v854 = vpop.permute.xlu0 %853
        %855 = vrot.lane.b32.xlu0 %v677, 124
        %v856 = vpop.permute.xlu0 %855
        %857 = vrot.lane.b32.xlu0 %v678, 124
        %v858 = vpop.permute.xlu0 %857
        %859 = vrot.lane.b32.xlu0 %v679, 124
        %v860 = vpop.permute.xlu0 %859
        %861 = vrot.lane.b32.xlu0 %v680, 124
        %v862 = vpop.permute.xlu0 %861
        %863 = vrot.lane.b32.xlu0 %v681, 124
        %v864 = vpop.permute.xlu0 %863
        %865 = vrot.lane.b32.xlu0 %v682, 124
        %v866 = vpop.permute.xlu0 %865
        %867 = vrot.lane.b32.xlu0 %v683, 124
        %v868 = vpop.permute.xlu0 %867
        %869 = vrot.lane.b32.xlu0 %v684, 124
        %v870 = vpop.permute.xlu0 %869
        %871 = vrot.lane.b32.xlu0 %v685, 124
        %v872 = vpop.permute.xlu0 %871
        %873 = vrot.lane.b32.xlu0 %v686, 124
        %v874 = vpop.permute.xlu0 %873
        %875 = vrot.lane.b32.xlu0 %v687, 124
        %v876 = vpop.permute.xlu0 %875
        %877 = vrot.lane.b32.xlu0 %v688, 124
        %v878 = vpop.permute.xlu0 %877
        %879 = vrot.lane.b32.xlu0 %v689, 124
        %v880 = vpop.permute.xlu0 %879
        %881 = vrot.lane.b32.xlu0 %v690, 124
        %v882 = vpop.permute.xlu0 %881
        %883 = vrot.lane.b32.xlu0 %v691, 124
        %v884 = vpop.permute.xlu0 %883
        %885 = vrot.lane.b32.xlu0 %v692, 124
        %v886 = vpop.permute.xlu0 %885
        %vm887 = vcmp.gt.f32.partialorder %v824, %v661
        %vm888 = vcmp.gt.f32.partialorder %v826, %v662
        %vm889 = vcmp.gt.f32.partialorder %v828, %v663
        %vm890 = vcmp.gt.f32.partialorder %v830, %v664
        %vm891 = vcmp.gt.f32.partialorder %v832, %v665
        %vm892 = vcmp.gt.f32.partialorder %v834, %v666
        %vm893 = vcmp.gt.f32.partialorder %v836, %v667
        %vm894 = vcmp.gt.f32.partialorder %v838, %v668
        %vm895 = vcmp.gt.f32.partialorder %v840, %v669
        %vm896 = vcmp.gt.f32.partialorder %v842, %v670
        %vm897 = vcmp.gt.f32.partialorder %v844, %v671
        %vm898 = vcmp.gt.f32.partialorder %v846, %v672
        %vm899 = vcmp.gt.f32.partialorder %v848, %v673
        %vm900 = vcmp.gt.f32.partialorder %v850, %v674
        %vm901 = vcmp.gt.f32.partialorder %v852, %v675
        %vm902 = vcmp.gt.f32.partialorder %v854, %v676
        %vm903 = vmand %vm694, %vm887
        %vm904 = vmand %vm694, %vm888
        %vm905 = vmand %vm694, %vm889
        %vm906 = vmand %vm694, %vm890
        %vm907 = vmand %vm694, %vm891
        %vm908 = vmand %vm694, %vm892
        %vm909 = vmand %vm694, %vm893
        %vm910 = vmand %vm694, %vm894
        %vm911 = vmand %vm694, %vm895
        %vm912 = vmand %vm694, %vm896
        %vm913 = vmand %vm694, %vm897
        %vm914 = vmand %vm694, %vm898
        %vm915 = vmand %vm694, %vm899
        %vm916 = vmand %vm694, %vm900
        %vm917 = vmand %vm694, %vm901
        %vm918 = vmand %vm694, %vm902
        %v919 = vsel %vm903, %v824, %v661
        %v920 = vsel %vm904, %v826, %v662
        %v921 = vsel %vm905, %v828, %v663
        %v922 = vsel %vm906, %v830, %v664
        %v923 = vsel %vm907, %v832, %v665
        %v924 = vsel %vm908, %v834, %v666
        %v925 = vsel %vm909, %v836, %v667
        %v926 = vsel %vm910, %v838, %v668
        %v927 = vsel %vm911, %v840, %v669
        %v928 = vsel %vm912, %v842, %v670
        %v929 = vsel %vm913, %v844, %v671
        %v930 = vsel %vm914, %v846, %v672
        %v931 = vsel %vm915, %v848, %v673
        %v932 = vsel %vm916, %v850, %v674
        %v933 = vsel %vm917, %v852, %v675
        %v934 = vsel %vm918, %v854, %v676
        %v935 = vsel %vm903, %v856, %v677
        %v936 = vsel %vm904, %v858, %v678
        %v937 = vsel %vm905, %v860, %v679
        %v938 = vsel %vm906, %v862, %v680
        %v939 = vsel %vm907, %v864, %v681
        %v940 = vsel %vm908, %v866, %v682
        %v941 = vsel %vm909, %v868, %v683
        %v942 = vsel %vm910, %v870, %v684
        %v943 = vsel %vm911, %v872, %v685
        %v944 = vsel %vm912, %v874, %v686
        %v945 = vsel %vm913, %v876, %v687
        %v946 = vsel %vm914, %v878, %v688
        %v947 = vsel %vm915, %v880, %v689
        %v948 = vsel %vm916, %v882, %v690
        %v949 = vsel %vm917, %v884, %v691
        %v950 = vsel %vm918, %v886, %v692
        %v951 = vadd.s32 %v238, 8
        %vm952 = vcmp.lt.s32.totalorder %v951, 32
        %953 = vrot.lane.b32.xlu0 %v791, 120
        %v954 = vpop.permute.xlu0 %953
        %955 = vrot.lane.b32.xlu0 %v792, 120
        %v956 = vpop.permute.xlu0 %955
        %957 = vrot.lane.b32.xlu0 %v793, 120
        %v958 = vpop.permute.xlu0 %957
        %959 = vrot.lane.b32.xlu0 %v794, 120
        %v960 = vpop.permute.xlu0 %959
        %961 = vrot.lane.b32.xlu0 %v795, 120
        %v962 = vpop.permute.xlu0 %961
        %963 = vrot.lane.b32.xlu0 %v796, 120
        %v964 = vpop.permute.xlu0 %963
        %965 = vrot.lane.b32.xlu0 %v797, 120
        %v966 = vpop.permute.xlu0 %965
        %967 = vrot.lane.b32.xlu0 %v798, 120
        %v968 = vpop.permute.xlu0 %967
        %969 = vrot.lane.b32.xlu0 %v799, 120
        %v970 = vpop.permute.xlu0 %969
        %971 = vrot.lane.b32.xlu0 %v800, 120
        %v972 = vpop.permute.xlu0 %971
        %973 = vrot.lane.b32.xlu0 %v801, 120
        %v974 = vpop.permute.xlu0 %973
        %975 = vrot.lane.b32.xlu0 %v802, 120
        %v976 = vpop.permute.xlu0 %975
        %977 = vrot.lane.b32.xlu0 %v803, 120
        %v978 = vpop.permute.xlu0 %977
        %979 = vrot.lane.b32.xlu0 %v804, 120
        %v980 = vpop.permute.xlu0 %979
        %981 = vrot.lane.b32.xlu0 %v805, 120
        %v982 = vpop.permute.xlu0 %981
        %983 = vrot.lane.b32.xlu0 %v806, 120
        %v984 = vpop.permute.xlu0 %983
        %985 = vrot.lane.b32.xlu0 %v807, 120
        %v986 = vpop.permute.xlu0 %985
        %987 = vrot.lane.b32.xlu0 %v808, 120
        %v988 = vpop.permute.xlu0 %987
        %989 = vrot.lane.b32.xlu0 %v809, 120
        %v990 = vpop.permute.xlu0 %989
        %991 = vrot.lane.b32.xlu0 %v810, 120
        %v992 = vpop.permute.xlu0 %991
        %993 = vrot.lane.b32.xlu0 %v811, 120
        %v994 = vpop.permute.xlu0 %993
        %995 = vrot.lane.b32.xlu0 %v812, 120
        %v996 = vpop.permute.xlu0 %995
        %997 = vrot.lane.b32.xlu0 %v813, 120
        %v998 = vpop.permute.xlu0 %997
        %999 = vrot.lane.b32.xlu0 %v814, 120
        %v1000 = vpop.permute.xlu0 %999
        %1001 = vrot.lane.b32.xlu0 %v815, 120
        %v1002 = vpop.permute.xlu0 %1001
        %1003 = vrot.lane.b32.xlu0 %v816, 120
        %v1004 = vpop.permute.xlu0 %1003
        %1005 = vrot.lane.b32.xlu0 %v817, 120
        %v1006 = vpop.permute.xlu0 %1005
        %1007 = vrot.lane.b32.xlu0 %v818, 120
        %v1008 = vpop.permute.xlu0 %1007
        %1009 = vrot.lane.b32.xlu0 %v819, 120
        %v1010 = vpop.permute.xlu0 %1009
        %1011 = vrot.lane.b32.xlu0 %v820, 120
        %v1012 = vpop.permute.xlu0 %1011
        %1013 = vrot.lane.b32.xlu0 %v821, 120
        %v1014 = vpop.permute.xlu0 %1013
        %1015 = vrot.lane.b32.xlu0 %v822, 120
        %v1016 = vpop.permute.xlu0 %1015
        %vm1017 = vcmp.gt.f32.partialorder %v954, %v791
        %vm1018 = vcmp.gt.f32.partialorder %v956, %v792
        %vm1019 = vcmp.gt.f32.partialorder %v958, %v793
        %vm1020 = vcmp.gt.f32.partialorder %v960, %v794
        %vm1021 = vcmp.gt.f32.partialorder %v962, %v795
        %vm1022 = vcmp.gt.f32.partialorder %v964, %v796
        %vm1023 = vcmp.gt.f32.partialorder %v966, %v797
        %vm1024 = vcmp.gt.f32.partialorder %v968, %v798
        %vm1025 = vcmp.gt.f32.partialorder %v970, %v799
        %vm1026 = vcmp.gt.f32.partialorder %v972, %v800
        %vm1027 = vcmp.gt.f32.partialorder %v974, %v801
        %vm1028 = vcmp.gt.f32.partialorder %v976, %v802
        %vm1029 = vcmp.gt.f32.partialorder %v978, %v803
        %vm1030 = vcmp.gt.f32.partialorder %v980, %v804
        %vm1031 = vcmp.gt.f32.partialorder %v982, %v805
        %vm1032 = vcmp.gt.f32.partialorder %v984, %v806
        %vm1033 = vmand %vm952, %vm1017
        %vm1034 = vmand %vm952, %vm1018
        %vm1035 = vmand %vm952, %vm1019
        %vm1036 = vmand %vm952, %vm1020
        %vm1037 = vmand %vm952, %vm1021
        %vm1038 = vmand %vm952, %vm1022
        %vm1039 = vmand %vm952, %vm1023
        %vm1040 = vmand %vm952, %vm1024
        %vm1041 = vmand %vm952, %vm1025
        %vm1042 = vmand %vm952, %vm1026
        %vm1043 = vmand %vm952, %vm1027
        %vm1044 = vmand %vm952, %vm1028
        %vm1045 = vmand %vm952, %vm1029
        %vm1046 = vmand %vm952, %vm1030
        %vm1047 = vmand %vm952, %vm1031
        %vm1048 = vmand %vm952, %vm1032
        %v1049 = vsel %vm1033, %v954, %v791
        %v1050 = vsel %vm1034, %v956, %v792
        %v1051 = vsel %vm1035, %v958, %v793
        %v1052 = vsel %vm1036, %v960, %v794
        %v1053 = vsel %vm1037, %v962, %v795
        %v1054 = vsel %vm1038, %v964, %v796
        %v1055 = vsel %vm1039, %v966, %v797
        %v1056 = vsel %vm1040, %v968, %v798
        %v1057 = vsel %vm1041, %v970, %v799
        %v1058 = vsel %vm1042, %v972, %v800
        %v1059 = vsel %vm1043, %v974, %v801
        %v1060 = vsel %vm1044, %v976, %v802
        %v1061 = vsel %vm1045, %v978, %v803
        %v1062 = vsel %vm1046, %v980, %v804
        %v1063 = vsel %vm1047, %v982, %v805
        %v1064 = vsel %vm1048, %v984, %v806
        %v1065 = vsel %vm1033, %v986, %v807
        %v1066 = vsel %vm1034, %v988, %v808
        %v1067 = vsel %vm1035, %v990, %v809
        %v1068 = vsel %vm1036, %v992, %v810
        %v1069 = vsel %vm1037, %v994, %v811
        %v1070 = vsel %vm1038, %v996, %v812
        %v1071 = vsel %vm1039, %v998, %v813
        %v1072 = vsel %vm1040, %v1000, %v814
        %v1073 = vsel %vm1041, %v1002, %v815
        %v1074 = vsel %vm1042, %v1004, %v816
        %v1075 = vsel %vm1043, %v1006, %v817
        %v1076 = vsel %vm1044, %v1008, %v818
        %v1077 = vsel %vm1045, %v1010, %v819
        %v1078 = vsel %vm1046, %v1012, %v820
        %v1079 = vsel %vm1047, %v1014, %v821
        %v1080 = vsel %vm1048, %v1016, %v822
        %1081 = vrot.lane.b32.xlu0 %v919, 120
        %v1082 = vpop.permute.xlu0 %1081
        %1083 = vrot.lane.b32.xlu0 %v920, 120
        %v1084 = vpop.permute.xlu0 %1083
        %1085 = vrot.lane.b32.xlu0 %v921, 120
        %v1086 = vpop.permute.xlu0 %1085
        %1087 = vrot.lane.b32.xlu0 %v922, 120
        %v1088 = vpop.permute.xlu0 %1087
        %1089 = vrot.lane.b32.xlu0 %v923, 120
        %v1090 = vpop.permute.xlu0 %1089
        %1091 = vrot.lane.b32.xlu0 %v924, 120
        %v1092 = vpop.permute.xlu0 %1091
        %1093 = vrot.lane.b32.xlu0 %v925, 120
        %v1094 = vpop.permute.xlu0 %1093
        %1095 = vrot.lane.b32.xlu0 %v926, 120
        %v1096 = vpop.permute.xlu0 %1095
        %1097 = vrot.lane.b32.xlu0 %v927, 120
        %v1098 = vpop.permute.xlu0 %1097
        %1099 = vrot.lane.b32.xlu0 %v928, 120
        %v1100 = vpop.permute.xlu0 %1099
        %1101 = vrot.lane.b32.xlu0 %v929, 120
        %v1102 = vpop.permute.xlu0 %1101
        %1103 = vrot.lane.b32.xlu0 %v930, 120
        %v1104 = vpop.permute.xlu0 %1103
        %1105 = vrot.lane.b32.xlu0 %v931, 120
        %v1106 = vpop.permute.xlu0 %1105
        %1107 = vrot.lane.b32.xlu0 %v932, 120
        %v1108 = vpop.permute.xlu0 %1107
        %1109 = vrot.lane.b32.xlu0 %v933, 120
        %v1110 = vpop.permute.xlu0 %1109
        %1111 = vrot.lane.b32.xlu0 %v934, 120
        %v1112 = vpop.permute.xlu0 %1111
        %1113 = vrot.lane.b32.xlu0 %v935, 120
        %v1114 = vpop.permute.xlu0 %1113
        %1115 = vrot.lane.b32.xlu0 %v936, 120
        %v1116 = vpop.permute.xlu0 %1115
        %1117 = vrot.lane.b32.xlu0 %v937, 120
        %v1118 = vpop.permute.xlu0 %1117
        %1119 = vrot.lane.b32.xlu0 %v938, 120
        %v1120 = vpop.permute.xlu0 %1119
        %1121 = vrot.lane.b32.xlu0 %v939, 120
        %v1122 = vpop.permute.xlu0 %1121
        %1123 = vrot.lane.b32.xlu0 %v940, 120
        %v1124 = vpop.permute.xlu0 %1123
        %1125 = vrot.lane.b32.xlu0 %v941, 120
        %v1126 = vpop.permute.xlu0 %1125
        %1127 = vrot.lane.b32.xlu0 %v942, 120
        %v1128 = vpop.permute.xlu0 %1127
        %1129 = vrot.lane.b32.xlu0 %v943, 120
        %v1130 = vpop.permute.xlu0 %1129
        %1131 = vrot.lane.b32.xlu0 %v944, 120
        %v1132 = vpop.permute.xlu0 %1131
        %1133 = vrot.lane.b32.xlu0 %v945, 120
        %v1134 = vpop.permute.xlu0 %1133
        %1135 = vrot.lane.b32.xlu0 %v946, 120
        %v1136 = vpop.permute.xlu0 %1135
        %1137 = vrot.lane.b32.xlu0 %v947, 120
        %v1138 = vpop.permute.xlu0 %1137
        %1139 = vrot.lane.b32.xlu0 %v948, 120
        %v1140 = vpop.permute.xlu0 %1139
        %1141 = vrot.lane.b32.xlu0 %v949, 120
        %v1142 = vpop.permute.xlu0 %1141
        %1143 = vrot.lane.b32.xlu0 %v950, 120
        %v1144 = vpop.permute.xlu0 %1143
        %vm1145 = vcmp.gt.f32.partialorder %v1082, %v919
        %vm1146 = vcmp.gt.f32.partialorder %v1084, %v920
        %vm1147 = vcmp.gt.f32.partialorder %v1086, %v921
        %vm1148 = vcmp.gt.f32.partialorder %v1088, %v922
        %vm1149 = vcmp.gt.f32.partialorder %v1090, %v923
        %vm1150 = vcmp.gt.f32.partialorder %v1092, %v924
        %vm1151 = vcmp.gt.f32.partialorder %v1094, %v925
        %vm1152 = vcmp.gt.f32.partialorder %v1096, %v926
        %vm1153 = vcmp.gt.f32.partialorder %v1098, %v927
        %vm1154 = vcmp.gt.f32.partialorder %v1100, %v928
        %vm1155 = vcmp.gt.f32.partialorder %v1102, %v929
        %vm1156 = vcmp.gt.f32.partialorder %v1104, %v930
        %vm1157 = vcmp.gt.f32.partialorder %v1106, %v931
        %vm1158 = vcmp.gt.f32.partialorder %v1108, %v932
        %vm1159 = vcmp.gt.f32.partialorder %v1110, %v933
        %vm1160 = vcmp.gt.f32.partialorder %v1112, %v934
        %vm1161 = vmand %vm952, %vm1145
        %vm1162 = vmand %vm952, %vm1146
        %vm1163 = vmand %vm952, %vm1147
        %vm1164 = vmand %vm952, %vm1148
        %vm1165 = vmand %vm952, %vm1149
        %vm1166 = vmand %vm952, %vm1150
        %vm1167 = vmand %vm952, %vm1151
        %vm1168 = vmand %vm952, %vm1152
        %vm1169 = vmand %vm952, %vm1153
        %vm1170 = vmand %vm952, %vm1154
        %vm1171 = vmand %vm952, %vm1155
        %vm1172 = vmand %vm952, %vm1156
        %vm1173 = vmand %vm952, %vm1157
        %vm1174 = vmand %vm952, %vm1158
        %vm1175 = vmand %vm952, %vm1159
        %vm1176 = vmand %vm952, %vm1160
        %v1177 = vsel %vm1161, %v1082, %v919
        %v1178 = vsel %vm1162, %v1084, %v920
        %v1179 = vsel %vm1163, %v1086, %v921
        %v1180 = vsel %vm1164, %v1088, %v922
        %v1181 = vsel %vm1165, %v1090, %v923
        %v1182 = vsel %vm1166, %v1092, %v924
        %v1183 = vsel %vm1167, %v1094, %v925
        %v1184 = vsel %vm1168, %v1096, %v926
        %v1185 = vsel %vm1169, %v1098, %v927
        %v1186 = vsel %vm1170, %v1100, %v928
        %v1187 = vsel %vm1171, %v1102, %v929
        %v1188 = vsel %vm1172, %v1104, %v930
        %v1189 = vsel %vm1173, %v1106, %v931
        %v1190 = vsel %vm1174, %v1108, %v932
        %v1191 = vsel %vm1175, %v1110, %v933
        %v1192 = vsel %vm1176, %v1112, %v934
        %v1193 = vsel %vm1161, %v1114, %v935
        %v1194 = vsel %vm1162, %v1116, %v936
        %v1195 = vsel %vm1163, %v1118, %v937
        %v1196 = vsel %vm1164, %v1120, %v938
        %v1197 = vsel %vm1165, %v1122, %v939
        %v1198 = vsel %vm1166, %v1124, %v940
        %v1199 = vsel %vm1167, %v1126, %v941
        %v1200 = vsel %vm1168, %v1128, %v942
        %v1201 = vsel %vm1169, %v1130, %v943
        %v1202 = vsel %vm1170, %v1132, %v944
        %v1203 = vsel %vm1171, %v1134, %v945
        %v1204 = vsel %vm1172, %v1136, %v946
        %v1205 = vsel %vm1173, %v1138, %v947
        %v1206 = vsel %vm1174, %v1140, %v948
        %v1207 = vsel %vm1175, %v1142, %v949
        %v1208 = vsel %vm1176, %v1144, %v950
        %v1209 = vadd.s32 %v238, 16
        %vm1210 = vcmp.lt.s32.totalorder %v1209, 32
        %1211 = vrot.lane.b32.xlu0 %v1049, 112
        %v1212 = vpop.permute.xlu0 %1211
        %1213 = vrot.lane.b32.xlu0 %v1050, 112
        %v1214 = vpop.permute.xlu0 %1213
        %1215 = vrot.lane.b32.xlu0 %v1051, 112
        %v1216 = vpop.permute.xlu0 %1215
        %1217 = vrot.lane.b32.xlu0 %v1052, 112
        %v1218 = vpop.permute.xlu0 %1217
        %1219 = vrot.lane.b32.xlu0 %v1053, 112
        %v1220 = vpop.permute.xlu0 %1219
        %1221 = vrot.lane.b32.xlu0 %v1054, 112
        %v1222 = vpop.permute.xlu0 %1221
        %1223 = vrot.lane.b32.xlu0 %v1055, 112
        %v1224 = vpop.permute.xlu0 %1223
        %1225 = vrot.lane.b32.xlu0 %v1056, 112
        %v1226 = vpop.permute.xlu0 %1225
        %1227 = vrot.lane.b32.xlu0 %v1057, 112
        %v1228 = vpop.permute.xlu0 %1227
        %1229 = vrot.lane.b32.xlu0 %v1058, 112
        %v1230 = vpop.permute.xlu0 %1229
        %1231 = vrot.lane.b32.xlu0 %v1059, 112
        %v1232 = vpop.permute.xlu0 %1231
        %1233 = vrot.lane.b32.xlu0 %v1060, 112
        %v1234 = vpop.permute.xlu0 %1233
        %1235 = vrot.lane.b32.xlu0 %v1061, 112
        %v1236 = vpop.permute.xlu0 %1235
        %1237 = vrot.lane.b32.xlu0 %v1062, 112
        %v1238 = vpop.permute.xlu0 %1237
        %1239 = vrot.lane.b32.xlu0 %v1063, 112
        %v1240 = vpop.permute.xlu0 %1239
        %1241 = vrot.lane.b32.xlu0 %v1064, 112
        %v1242 = vpop.permute.xlu0 %1241
        %1243 = vrot.lane.b32.xlu0 %v1065, 112
        %v1244 = vpop.permute.xlu0 %1243
        %1245 = vrot.lane.b32.xlu0 %v1066, 112
        %v1246 = vpop.permute.xlu0 %1245
        %1247 = vrot.lane.b32.xlu0 %v1067, 112
        %v1248 = vpop.permute.xlu0 %1247
        %1249 = vrot.lane.b32.xlu0 %v1068, 112
        %v1250 = vpop.permute.xlu0 %1249
        %1251 = vrot.lane.b32.xlu0 %v1069, 112
        %v1252 = vpop.permute.xlu0 %1251
        %1253 = vrot.lane.b32.xlu0 %v1070, 112
        %v1254 = vpop.permute.xlu0 %1253
        %1255 = vrot.lane.b32.xlu0 %v1071, 112
        %v1256 = vpop.permute.xlu0 %1255
        %1257 = vrot.lane.b32.xlu0 %v1072, 112
        %v1258 = vpop.permute.xlu0 %1257
        %1259 = vrot.lane.b32.xlu0 %v1073, 112
        %v1260 = vpop.permute.xlu0 %1259
        %1261 = vrot.lane.b32.xlu0 %v1074, 112
        %v1262 = vpop.permute.xlu0 %1261
        %1263 = vrot.lane.b32.xlu0 %v1075, 112
        %v1264 = vpop.permute.xlu0 %1263
        %1265 = vrot.lane.b32.xlu0 %v1076, 112
        %v1266 = vpop.permute.xlu0 %1265
        %1267 = vrot.lane.b32.xlu0 %v1077, 112
        %v1268 = vpop.permute.xlu0 %1267
        %1269 = vrot.lane.b32.xlu0 %v1078, 112
        %v1270 = vpop.permute.xlu0 %1269
        %1271 = vrot.lane.b32.xlu0 %v1079, 112
        %v1272 = vpop.permute.xlu0 %1271
        %1273 = vrot.lane.b32.xlu0 %v1080, 112
        %v1274 = vpop.permute.xlu0 %1273
        %vm1275 = vcmp.gt.f32.partialorder %v1212, %v1049
        %vm1276 = vcmp.gt.f32.partialorder %v1214, %v1050
        %vm1277 = vcmp.gt.f32.partialorder %v1216, %v1051
        %vm1278 = vcmp.gt.f32.partialorder %v1218, %v1052
        %vm1279 = vcmp.gt.f32.partialorder %v1220, %v1053
        %vm1280 = vcmp.gt.f32.partialorder %v1222, %v1054
        %vm1281 = vcmp.gt.f32.partialorder %v1224, %v1055
        %vm1282 = vcmp.gt.f32.partialorder %v1226, %v1056
        %vm1283 = vcmp.gt.f32.partialorder %v1228, %v1057
        %vm1284 = vcmp.gt.f32.partialorder %v1230, %v1058
        %vm1285 = vcmp.gt.f32.partialorder %v1232, %v1059
        %vm1286 = vcmp.gt.f32.partialorder %v1234, %v1060
        %vm1287 = vcmp.gt.f32.partialorder %v1236, %v1061
        %vm1288 = vcmp.gt.f32.partialorder %v1238, %v1062
        %vm1289 = vcmp.gt.f32.partialorder %v1240, %v1063
        %vm1290 = vcmp.gt.f32.partialorder %v1242, %v1064
        %vm1291 = vmand %vm1210, %vm1275
        %vm1292 = vmand %vm1210, %vm1276
        %vm1293 = vmand %vm1210, %vm1277
        %vm1294 = vmand %vm1210, %vm1278
        %vm1295 = vmand %vm1210, %vm1279
        %vm1296 = vmand %vm1210, %vm1280
        %vm1297 = vmand %vm1210, %vm1281
        %vm1298 = vmand %vm1210, %vm1282
        %vm1299 = vmand %vm1210, %vm1283
        %vm1300 = vmand %vm1210, %vm1284
        %vm1301 = vmand %vm1210, %vm1285
        %vm1302 = vmand %vm1210, %vm1286
        %vm1303 = vmand %vm1210, %vm1287
        %vm1304 = vmand %vm1210, %vm1288
        %vm1305 = vmand %vm1210, %vm1289
        %vm1306 = vmand %vm1210, %vm1290
        %v1307 = vsel %vm1291, %v1244, %v1065
        %v1308 = vsel %vm1292, %v1246, %v1066
        %v1309 = vsel %vm1293, %v1248, %v1067
        %v1310 = vsel %vm1294, %v1250, %v1068
        %v1311 = vsel %vm1295, %v1252, %v1069
        %v1312 = vsel %vm1296, %v1254, %v1070
        %v1313 = vsel %vm1297, %v1256, %v1071
        %v1314 = vsel %vm1298, %v1258, %v1072
        %v1315 = vsel %vm1299, %v1260, %v1073
        %v1316 = vsel %vm1300, %v1262, %v1074
        %v1317 = vsel %vm1301, %v1264, %v1075
        %v1318 = vsel %vm1302, %v1266, %v1076
        %v1319 = vsel %vm1303, %v1268, %v1077
        %v1320 = vsel %vm1304, %v1270, %v1078
        %v1321 = vsel %vm1305, %v1272, %v1079
        %v1322 = vsel %vm1306, %v1274, %v1080
        %1323 = vrot.lane.b32.xlu0 %v1177, 112
        %v1324 = vpop.permute.xlu0 %1323
        %1325 = vrot.lane.b32.xlu0 %v1178, 112
        %v1326 = vpop.permute.xlu0 %1325
        %1327 = vrot.lane.b32.xlu0 %v1179, 112
        %v1328 = vpop.permute.xlu0 %1327
        %1329 = vrot.lane.b32.xlu0 %v1180, 112
        %v1330 = vpop.permute.xlu0 %1329
        %1331 = vrot.lane.b32.xlu0 %v1181, 112
        %v1332 = vpop.permute.xlu0 %1331
        %1333 = vrot.lane.b32.xlu0 %v1182, 112
        %v1334 = vpop.permute.xlu0 %1333
        %1335 = vrot.lane.b32.xlu0 %v1183, 112
        %v1336 = vpop.permute.xlu0 %1335
        %1337 = vrot.lane.b32.xlu0 %v1184, 112
        %v1338 = vpop.permute.xlu0 %1337
        %1339 = vrot.lane.b32.xlu0 %v1185, 112
        %v1340 = vpop.permute.xlu0 %1339
        %1341 = vrot.lane.b32.xlu0 %v1186, 112
        %v1342 = vpop.permute.xlu0 %1341
        %1343 = vrot.lane.b32.xlu0 %v1187, 112
        %v1344 = vpop.permute.xlu0 %1343
        %1345 = vrot.lane.b32.xlu0 %v1188, 112
        %v1346 = vpop.permute.xlu0 %1345
        %1347 = vrot.lane.b32.xlu0 %v1189, 112
        %v1348 = vpop.permute.xlu0 %1347
        %1349 = vrot.lane.b32.xlu0 %v1190, 112
        %v1350 = vpop.permute.xlu0 %1349
        %1351 = vrot.lane.b32.xlu0 %v1191, 112
        %v1352 = vpop.permute.xlu0 %1351
        %1353 = vrot.lane.b32.xlu0 %v1192, 112
        %v1354 = vpop.permute.xlu0 %1353
        %1355 = vrot.lane.b32.xlu0 %v1193, 112
        %v1356 = vpop.permute.xlu0 %1355
        %1357 = vrot.lane.b32.xlu0 %v1194, 112
        %v1358 = vpop.permute.xlu0 %1357
        %1359 = vrot.lane.b32.xlu0 %v1195, 112
        %v1360 = vpop.permute.xlu0 %1359
        %1361 = vrot.lane.b32.xlu0 %v1196, 112
        %v1362 = vpop.permute.xlu0 %1361
        %1363 = vrot.lane.b32.xlu0 %v1197, 112
        %v1364 = vpop.permute.xlu0 %1363
        %1365 = vrot.lane.b32.xlu0 %v1198, 112
        %v1366 = vpop.permute.xlu0 %1365
        %1367 = vrot.lane.b32.xlu0 %v1199, 112
        %v1368 = vpop.permute.xlu0 %1367
        %1369 = vrot.lane.b32.xlu0 %v1200, 112
        %v1370 = vpop.permute.xlu0 %1369
        %1371 = vrot.lane.b32.xlu0 %v1201, 112
        %v1372 = vpop.permute.xlu0 %1371
        %1373 = vrot.lane.b32.xlu0 %v1202, 112
        %v1374 = vpop.permute.xlu0 %1373
        %1375 = vrot.lane.b32.xlu0 %v1203, 112
        %v1376 = vpop.permute.xlu0 %1375
        %1377 = vrot.lane.b32.xlu0 %v1204, 112
        %v1378 = vpop.permute.xlu0 %1377
        %1379 = vrot.lane.b32.xlu0 %v1205, 112
        %v1380 = vpop.permute.xlu0 %1379
        %1381 = vrot.lane.b32.xlu0 %v1206, 112
        %v1382 = vpop.permute.xlu0 %1381
        %1383 = vrot.lane.b32.xlu0 %v1207, 112
        %v1384 = vpop.permute.xlu0 %1383
        %1385 = vrot.lane.b32.xlu0 %v1208, 112
        %v1386 = vpop.permute.xlu0 %1385
        %vm1387 = vcmp.gt.f32.partialorder %v1324, %v1177
        %vm1388 = vcmp.gt.f32.partialorder %v1326, %v1178
        %vm1389 = vcmp.gt.f32.partialorder %v1328, %v1179
        %vm1390 = vcmp.gt.f32.partialorder %v1330, %v1180
        %vm1391 = vcmp.gt.f32.partialorder %v1332, %v1181
        %vm1392 = vcmp.gt.f32.partialorder %v1334, %v1182
        %vm1393 = vcmp.gt.f32.partialorder %v1336, %v1183
        %vm1394 = vcmp.gt.f32.partialorder %v1338, %v1184
        %vm1395 = vcmp.gt.f32.partialorder %v1340, %v1185
        %vm1396 = vcmp.gt.f32.partialorder %v1342, %v1186
        %vm1397 = vcmp.gt.f32.partialorder %v1344, %v1187
        %vm1398 = vcmp.gt.f32.partialorder %v1346, %v1188
        %vm1399 = vcmp.gt.f32.partialorder %v1348, %v1189
        %vm1400 = vcmp.gt.f32.partialorder %v1350, %v1190
        %vm1401 = vcmp.gt.f32.partialorder %v1352, %v1191
        %vm1402 = vcmp.gt.f32.partialorder %v1354, %v1192
        %vm1403 = vmand %vm1210, %vm1387
        %vm1404 = vmand %vm1210, %vm1388
        %vm1405 = vmand %vm1210, %vm1389
        %vm1406 = vmand %vm1210, %vm1390
        %vm1407 = vmand %vm1210, %vm1391
        %vm1408 = vmand %vm1210, %vm1392
        %vm1409 = vmand %vm1210, %vm1393
        %vm1410 = vmand %vm1210, %vm1394
        %vm1411 = vmand %vm1210, %vm1395
        %vm1412 = vmand %vm1210, %vm1396
        %vm1413 = vmand %vm1210, %vm1397
        %vm1414 = vmand %vm1210, %vm1398
        %vm1415 = vmand %vm1210, %vm1399
        %vm1416 = vmand %vm1210, %vm1400
        %vm1417 = vmand %vm1210, %vm1401
        %vm1418 = vmand %vm1210, %vm1402
        %v1419 = vsel %vm1403, %v1356, %v1193
        %v1420 = vsel %vm1404, %v1358, %v1194
        %v1421 = vsel %vm1405, %v1360, %v1195
        %v1422 = vsel %vm1406, %v1362, %v1196
        %v1423 = vsel %vm1407, %v1364, %v1197
        %v1424 = vsel %vm1408, %v1366, %v1198
        %v1425 = vsel %vm1409, %v1368, %v1199
        %v1426 = vsel %vm1410, %v1370, %v1200
        %v1427 = vsel %vm1411, %v1372, %v1201
        %v1428 = vsel %vm1412, %v1374, %v1202
        %v1429 = vsel %vm1413, %v1376, %v1203
        %v1430 = vsel %vm1414, %v1378, %v1204
        %v1431 = vsel %vm1415, %v1380, %v1205
        %v1432 = vsel %vm1416, %v1382, %v1206
        %v1433 = vsel %vm1417, %v1384, %v1207
        %v1434 = vsel %vm1418, %v1386, %v1208
        %v1435 = vlaneseq
        %v1436 = vshrl.u32 %v1435, 7
        %v1437 = vadd.s32 %v1436, 8
        %v1438 = vadd.s32 %v1436, 16
        %v1439 = vadd.s32 %v1436, 24
        %v1440 = vadd.s32 %v1436, 32
        %v1441 = vadd.s32 %v1436, 40
        %v1442 = vadd.s32 %v1436, 48
        %v1443 = vadd.s32 %v1436, 56
        %v1444 = vadd.s32 %v1436, 64
        %v1445 = vadd.s32 %v1436, 72
        %v1446 = vadd.s32 %v1436, 80
        %v1447 = vadd.s32 %v1436, 88
        %v1448 = vadd.s32 %v1436, 96
        %v1449 = vadd.s32 %v1436, 104
        %v1450 = vadd.s32 %v1436, 112
        %v1451 = vadd.s32 %v1436, 120
        %v1452 = vshra.s32 %v237, 5
        %s1453 = smul.u32 %s22, 128
        %v1454 = vstv %s1453
        %v1455 = vadd.s32 %v1454, %v1436
        %v1456 = vadd.s32 %v1454, %v1437
        %v1457 = vadd.s32 %v1454, %v1438
        %v1458 = vadd.s32 %v1454, %v1439
        %v1459 = vadd.s32 %v1454, %v1440
        %v1460 = vadd.s32 %v1454, %v1441
        %v1461 = vadd.s32 %v1454, %v1442
        %v1462 = vadd.s32 %v1454, %v1443
        %v1463 = vadd.s32 %v1454, %v1444
        %v1464 = vadd.s32 %v1454, %v1445
        %v1465 = vadd.s32 %v1454, %v1446
        %v1466 = vadd.s32 %v1454, %v1447
        %v1467 = vadd.s32 %v1454, %v1448
        %v1468 = vadd.s32 %v1454, %v1449
        %v1469 = vadd.s32 %v1454, %v1450
        %v1470 = vadd.s32 %v1454, %v1451
        %v1471 = vmul.u32 %v1455, 4
        %v1472 = vmul.u32 %v1456, 4
        %v1473 = vmul.u32 %v1457, 4
        %v1474 = vmul.u32 %v1458, 4
        %v1475 = vmul.u32 %v1459, 4
        %v1476 = vmul.u32 %v1460, 4
        %v1477 = vmul.u32 %v1461, 4
        %v1478 = vmul.u32 %v1462, 4
        %v1479 = vmul.u32 %v1463, 4
        %v1480 = vmul.u32 %v1464, 4
        %v1481 = vmul.u32 %v1465, 4
        %v1482 = vmul.u32 %v1466, 4
        %v1483 = vmul.u32 %v1467, 4
        %v1484 = vmul.u32 %v1468, 4
        %v1485 = vmul.u32 %v1469, 4
        %v1486 = vmul.u32 %v1470, 4
        %v1487 = vadd.s32 %v1471, %v1452
        %v1488 = vadd.s32 %v1472, %v1452
        %v1489 = vadd.s32 %v1473, %v1452
        %v1490 = vadd.s32 %v1474, %v1452
        %v1491 = vadd.s32 %v1475, %v1452
        %v1492 = vadd.s32 %v1476, %v1452
        %v1493 = vadd.s32 %v1477, %v1452
        %v1494 = vadd.s32 %v1478, %v1452
        %v1495 = vadd.s32 %v1479, %v1452
        %v1496 = vadd.s32 %v1480, %v1452
        %v1497 = vadd.s32 %v1481, %v1452
        %v1498 = vadd.s32 %v1482, %v1452
        %v1499 = vadd.s32 %v1483, %v1452
        %v1500 = vadd.s32 %v1484, %v1452
        %v1501 = vadd.s32 %v1485, %v1452
        %v1502 = vadd.s32 %v1486, %v1452
        %vm1503 = vcmp.eq.s32.totalorder %v238, 0
        %vm1504 = vcmp.lt.s32.totalorder %v1487, 1024
        %vm1505 = vcmp.lt.s32.totalorder %v1488, 1024
        %vm1506 = vcmp.lt.s32.totalorder %v1489, 1024
        %vm1507 = vcmp.lt.s32.totalorder %v1490, 1024
        %vm1508 = vcmp.lt.s32.totalorder %v1491, 1024
        %vm1509 = vcmp.lt.s32.totalorder %v1492, 1024
        %vm1510 = vcmp.lt.s32.totalorder %v1493, 1024
        %vm1511 = vcmp.lt.s32.totalorder %v1494, 1024
        %vm1512 = vcmp.lt.s32.totalorder %v1495, 1024
        %vm1513 = vcmp.lt.s32.totalorder %v1496, 1024
        %vm1514 = vcmp.lt.s32.totalorder %v1497, 1024
        %vm1515 = vcmp.lt.s32.totalorder %v1498, 1024
        %vm1516 = vcmp.lt.s32.totalorder %v1499, 1024
        %vm1517 = vcmp.lt.s32.totalorder %v1500, 1024
        %vm1518 = vcmp.lt.s32.totalorder %v1501, 1024
        %vm1519 = vcmp.lt.s32.totalorder %v1502, 1024
        %vm1520 = vmand %vm1503, %vm1504
        %vm1521 = vmand %vm1503, %vm1505
        %vm1522 = vmand %vm1503, %vm1506
        %vm1523 = vmand %vm1503, %vm1507
        %vm1524 = vmand %vm1503, %vm1508
        %vm1525 = vmand %vm1503, %vm1509
        %vm1526 = vmand %vm1503, %vm1510
        %vm1527 = vmand %vm1503, %vm1511
        %vm1528 = vmand %vm1503, %vm1512
        %vm1529 = vmand %vm1503, %vm1513
        %vm1530 = vmand %vm1503, %vm1514
        %vm1531 = vmand %vm1503, %vm1515
        %vm1532 = vmand %vm1503, %vm1516
        %vm1533 = vmand %vm1503, %vm1517
        %vm1534 = vmand %vm1503, %vm1518
        %vm1535 = vmand %vm1503, %vm1519
        %vm1536 = vcmp.eq.s32.totalorder %v1307, %v1419
        %vm1537 = vcmp.eq.s32.totalorder %v1308, %v1420
        %vm1538 = vcmp.eq.s32.totalorder %v1309, %v1421
        %vm1539 = vcmp.eq.s32.totalorder %v1310, %v1422
        %vm1540 = vcmp.eq.s32.totalorder %v1311, %v1423
        %vm1541 = vcmp.eq.s32.totalorder %v1312, %v1424
        %vm1542 = vcmp.eq.s32.totalorder %v1313, %v1425
        %vm1543 = vcmp.eq.s32.totalorder %v1314, %v1426
        %vm1544 = vcmp.eq.s32.totalorder %v1315, %v1427
        %vm1545 = vcmp.eq.s32.totalorder %v1316, %v1428
        %vm1546 = vcmp.eq.s32.totalorder %v1317, %v1429
        %vm1547 = vcmp.eq.s32.totalorder %v1318, %v1430
        %vm1548 = vcmp.eq.s32.totalorder %v1319, %v1431
        %vm1549 = vcmp.eq.s32.totalorder %v1320, %v1432
        %vm1550 = vcmp.eq.s32.totalorder %v1321, %v1433
        %vm1551 = vcmp.eq.s32.totalorder %v1322, %v1434
        %vm1552 = vmand %vm1520, %vm1536
        %vm1553 = vmand %vm1521, %vm1537
        %vm1554 = vmand %vm1522, %vm1538
        %vm1555 = vmand %vm1523, %vm1539
        %vm1556 = vmand %vm1524, %vm1540
        %vm1557 = vmand %vm1525, %vm1541
        %vm1558 = vmand %vm1526, %vm1542
        %vm1559 = vmand %vm1527, %vm1543
        %vm1560 = vmand %vm1528, %vm1544
        %vm1561 = vmand %vm1529, %vm1545
        %vm1562 = vmand %vm1530, %vm1546
        %vm1563 = vmand %vm1531, %vm1547
        %vm1564 = vmand %vm1532, %vm1548
        %vm1565 = vmand %vm1533, %vm1549
        %vm1566 = vmand %vm1534, %vm1550
        %vm1567 = vmand %vm1535, %vm1551
        %v1568 = vsel %vm1552, 1, 0
        %v1569 = vsel %vm1553, 1, 0
        %v1570 = vsel %vm1554, 1, 0
        %v1571 = vsel %vm1555, 1, 0
        %v1572 = vsel %vm1556, 1, 0
        %v1573 = vsel %vm1557, 1, 0
        %v1574 = vsel %vm1558, 1, 0
        %v1575 = vsel %vm1559, 1, 0
        %v1576 = vsel %vm1560, 1, 0
        %v1577 = vsel %vm1561, 1, 0
        %v1578 = vsel %vm1562, 1, 0
        %v1579 = vsel %vm1563, 1, 0
        %v1580 = vsel %vm1564, 1, 0
        %v1581 = vsel %vm1565, 1, 0
        %v1582 = vsel %vm1566, 1, 0
        %v1583 = vsel %vm1567, 1, 0
        %v1584 = vcvt.s32.f32 %v1568
        %v1585 = vcvt.s32.f32 %v1569
        %v1586 = vcvt.s32.f32 %v1570
        %v1587 = vcvt.s32.f32 %v1571
        %v1588 = vcvt.s32.f32 %v1572
        %v1589 = vcvt.s32.f32 %v1573
        %v1590 = vcvt.s32.f32 %v1574
        %v1591 = vcvt.s32.f32 %v1575
        %v1592 = vcvt.s32.f32 %v1576
        %v1593 = vcvt.s32.f32 %v1577
        %v1594 = vcvt.s32.f32 %v1578
        %v1595 = vcvt.s32.f32 %v1579
        %v1596 = vcvt.s32.f32 %v1580
        %v1597 = vcvt.s32.f32 %v1581
        %v1598 = vcvt.s32.f32 %v1582
        %v1599 = vcvt.s32.f32 %v1583
        %v1600 = vadd.f32 %v1584, %v1585
        %v1601 = vadd.f32 %v1600, %v1586
        %v1602 = vadd.f32 %v1601, %v1587
        %v1603 = vadd.f32 %v1602, %v1588
        %v1604 = vadd.f32 %v1603, %v1589
        %v1605 = vadd.f32 %v1604, %v1590
        %v1606 = vadd.f32 %v1605, %v1591
        %v1607 = vadd.f32 %v1606, %v1592
        %v1608 = vadd.f32 %v1607, %v1593
        %v1609 = vadd.f32 %v1608, %v1594
        %v1610 = vadd.f32 %v1609, %v1595
        %v1611 = vadd.f32 %v1610, %v1596
        %v1612 = vadd.f32 %v1611, %v1597
        %v1613 = vadd.f32 %v1612, %v1598
        %v1614 = vadd.f32 %v1613, %v1599
        %1615 = vadd.xlane.f32.xlu0 %v1614
        %v1616 = vpop.xlane.xlu0 %1615
        %v1617 = vrot.slane %v1616, 4
        %v1618 = vadd.f32 %v1616, %v1617
        %v1619 = vrot.slane %v1618, 2
        %v1620 = vadd.f32 %v1618, %v1619
        %v1621 = vrot.slane %v1620, 1
        %v1622 = vadd.f32 %v1620, %v1621
        %s1623 = vtos %v1622
        %v1624 = vstv %s1623
        %1625 = vst [vmem:[%s201] sm:$0xff] %v1624
        %s1626 = sand.u32 %s82, 1
        %s1627 = scalar_lea.sflag [#allocation4], %s1626
        %s1628 = sand.u32 %s82, 1
        %s1629 = smul.addr %s1628, 8
        %s1630 = scalar_lea.vmem [#allocation7], %s1629
        // Predicated region
        $region37: #{tpu_custom_call.1} parent=27 // pred_check
          %p1631 = pneg %p92
        $region38: #{tpu_custom_call.1} parent=27 // pred_check_branch
          %1633 = sbr.rel (%p1631) target = $region40
        $region39: #{tpu_custom_call.1} parent=27 // pred_region
          %s1635 = ssub.s32 128, 128
          %1636 = vsyncadd %s1627, %s1635
          %s1637 = smul.addr %s22, 128
          %s1638 = scalar_lea.hbm %s2, %s1637
          %s1640 = sshll.u32 %s1630, 4
          %s1641 = int_to_ptr.vmem [resolvable:$true] %s1640
          %1643 = dma.vmem_to_hbm [thread:$0]  %s1641, 128, %s1638, %s1627
        $region40: #{tpu_custom_call.1} parent=27 // pred_fallthru
          _
      $region28: #{tpu_custom_call.1} parent=5 // pred_fallthru
        _
      %p1644 = scmp.le.s32.totalorder 2, %s17
      // Predicated region
      $region41: #{tpu_custom_call.1} parent=5 // pred_check
        %p1645 = pneg %p1644
      $region42: #{tpu_custom_call.1} parent=5 // pred_check_branch
        %1647 = sbr.rel (%p1645) target = $region44
      $region43: #{tpu_custom_call.1} parent=5 // pred_region
        %s1648 = ssub.s32 %s17, 2
        // Predicated region
        $region45: #{tpu_custom_call.1} parent=43 // pred_check
          %p1649 = pneg %p98
        $region46: #{tpu_custom_call.1} parent=43 // pred_check_branch
          %1651 = sbr.rel (%p1649) target = $region48
        $region47: #{tpu_custom_call.1} parent=43 // pred_region
          %s1652 = sand.u32 %s83, 1
          %s1653 = scalar_lea.sflag [#allocation4], %s1652
          %s1654 = sand.u32 %s83, 1
          %s1655 = smul.addr %s1654, 8
          %s1656 = scalar_lea.vmem [#allocation7], %s1655
          %1657 = dma.done %s1653, 128
        $region48: #{tpu_custom_call.1} parent=43 // pred_fallthru
          _
      $region44: #{tpu_custom_call.1} parent=5 // pred_fallthru
        _
    $region6: #{tpu_custom_call.1} parent=1 // loop_footer
      %s21 = sadd.s32 1, %s17
    $region7: #{tpu_custom_call.1} parent=1 // loop_footer_branch
      %16 = sbr.rel target = $region3
    $region8: #{tpu_custom_call.1} parent=1 // loop_exit
      _
    %1658 = vsyncpa [#allocation3], 1
    %s1659 = scalar_lea.sflag [#allocation3], 1
    %1660 = vsyncpa %s1659, 1
    %1661 = vsyncpa [#allocation6], 1
    %s1662 = scalar_lea.sflag [#allocation6], 1
    %1663 = vsyncpa %s1662, 1
    %1664 = vsyncpa [#allocation4], 1
    %s1665 = scalar_lea.sflag [#allocation4], 1
    %1666 = vsyncpa %s1665, 1

</llo_original>
